<compile_context>
chip_gen: v6e
topology: v6e:2x2x1
jax: 0.10.0
libtpu: 0.0.40
codegen_flags: <defaults>
</compile_context>

<pallas_src>
from functools import partial

import numpy as np
import jax
import jax.numpy as jnp
from jax.experimental import pallas as pl
from jax.experimental.pallas import tpu as pltpu


# ----------------------------- host glue: linear-map matrices ------------------------ #
def adaptive_pool_matrix(out_size, in_size):
    """1-D adaptive average pooling as a matrix (PyTorch AdaptiveAvgPool semantics)."""
    M = np.zeros((out_size, in_size), np.float32)
    for i in range(out_size):
        s = (i * in_size) // out_size
        e = -((-(i + 1) * in_size) // out_size)  # ceil((i+1)*in/out)
        M[i, s:e] = 1.0 / (e - s)
    return M


def bilinear_matrix(out_size, in_size):
    """1-D bilinear interpolation (align_corners=False, which is what
    F.interpolate(..., mode='bilinear', align_corners=None) means)."""
    M = np.zeros((out_size, in_size), np.float32)
    if in_size == 1:
        M[:, 0] = 1.0
        return M
    scale = in_size / out_size
    for d in range(out_size):
        src = (d + 0.5) * scale - 0.5
        src = max(src, 0.0)
        i0 = min(int(np.floor(src)), in_size - 1)
        i1 = min(i0 + 1, in_size - 1)
        lam = src - i0
        M[d, i0] += 1.0 - lam
        M[d, i1] += lam
    return M


def build_branch_mats(H, W, pool_scales):
    mats = []
    for p in pool_scales:
        P2 = np.kron(adaptive_pool_matrix(p, H), adaptive_pool_matrix(p, W))  # (pp, HW)
        U2 = np.kron(bilinear_matrix(H, p), bilinear_matrix(W, p))            # (HW, pp)
        mats.append((P2.astype(np.float32), U2.astype(np.float32)))
    return mats


def _pad_hw(hw):
    """Pad the flattened spatial size up to a multiple of 128 lanes."""
    return ((hw + 127) // 128) * 128


def build_constants(params, mats, H, W):
    """Fold BN + biases into weights and pack all branch constants for the fused kernel."""
    HW = H * W
    HWp = _pad_hw(HW)
    Cin = params["ppm"][0]["w"].shape[0]
    Co = params["ppm"][0]["w"].shape[1]
    NB = len(mats)
    wb = np.asarray(params["bott"]["w"], np.float32)      # (3, 3, Ct, Cofin), HWIO
    Ct, Cofin = wb.shape[2], wb.shape[3]

    P_all = np.concatenate([P2 for P2, _ in mats], axis=0)     # (SPP, HW)
    U_all = np.concatenate([U2.T for _, U2 in mats], axis=0)   # (SPP, HW)
    SPP = P_all.shape[0]
    pT = np.zeros((HWp, SPP), np.float32); pT[:HW, :] = P_all.T   # lane-padded
    uT = np.zeros((SPP, HWp), np.float32); uT[:, :HW] = U_all     # lane-padded

    w1 = np.zeros((NB * Co, Cin), np.float32)
    b1 = np.zeros((NB * Co, 1), np.float32)
    a1 = np.zeros((NB * Co, 1), np.float32)
    bmask = np.zeros((NB * Co, SPP), np.float32)
    off = 0
    for bi, ((P2, _), br) in enumerate(zip(mats, params["ppm"])):
        pp = P2.shape[0]
        w = np.asarray(br["w"], np.float32)           # (Cin, Co)
        bias = np.asarray(br["b"], np.float32)        # (Co,)
        scale = np.asarray(br["scale"], np.float32)   # (Co,)
        shift = np.asarray(br["shift"], np.float32)   # (Co,)
        rows = slice(bi * Co, (bi + 1) * Co)
        w1[rows] = w.T * scale[:, None]               # fold BN scale into 1x1 weights
        b1[rows, 0] = bias * scale + shift            # fold conv bias + BN shift
        a1[rows, 0] = float(br["alpha"])              # per-branch PReLU alpha
        bmask[rows, off:off + pp] = 1.0               # block-diagonal branch selector
        off += pp

    bt = params["bott"]
    bias2 = np.asarray(bt["b"], np.float32)
    scale2 = np.asarray(bt["scale"], np.float32)
    shift2 = np.asarray(bt["shift"], np.float32)
    wc = np.zeros((9 * Cofin, Ct), np.float32)        # fused 3x3 weights, BN folded
    for ky in range(3):
        for kx in range(3):
            t = ky * 3 + kx
            wc[t * Cofin:(t + 1) * Cofin, :] = wb[ky, kx].T * scale2[:, None]
    b2 = (bias2 * scale2 + shift2)[:, None].astype(np.float32)
    a2 = np.full((Cofin, 1), float(bt["alpha"]), np.float32)

    # Per-tap boundary masks for the SAME-padded 3x3 conv: tmask[t, 0, y*W+x] = 1 iff
    # the tap's source pixel (y+dy, x+dx) lies inside the image (padding / wrap -> 0).
    tmask = np.zeros((9, 1, HWp), np.float32)
    for ky in range(3):
        for kx in range(3):
            t = ky * 3 + kx
            dy, dx = ky - 1, kx - 1
            yy = np.arange(H)[:, None]
            xx = np.arange(W)[None, :]
            valid = ((yy + dy >= 0) & (yy + dy < H) & (xx + dx >= 0) & (xx + dx < W))
            tmask[t, 0, :HW] = valid.reshape(-1).astype(np.float32)

    return dict(
        pT=jnp.asarray(pT), uT=jnp.asarray(uT),
        w1=jnp.asarray(w1), b1=jnp.asarray(b1), a1=jnp.asarray(a1),
        bmask=jnp.asarray(bmask), wc=jnp.asarray(wc), tmask=jnp.asarray(tmask),
        b2=jnp.asarray(b2), a2=jnp.asarray(a2),
    )


# ----------------------------------- fused Pallas kernel ----------------------------- #
def _make_kernel(H, W, HWp, Cin, NBCo, Cofin, Nb):
    HW = H * W

    def kernel(x_ref, pT_ref, uT_ref, w1_ref, b1_ref, a1_ref, bmask_ref,
               wc_ref, tmask_ref, b2_ref, a2_ref, o_ref):
        # x_ref:  (Nb, Cin, HWp)  channels-first, H*W zero-padded onto the lane axis
        # pT:     (HWp, SPP)      stacked adaptive-pool matrices (transposed, padded)
        # uT:     (SPP, HWp)      stacked bilinear-upsample matrices (padded)
        # w1/b1/a1/bmask:         folded 1x1-conv weights / bias+BN shift / PReLU alpha
        #                         / block-diagonal branch selector (all branches stacked)
        # wc:     (9*Cofin, Ct)   folded 3x3-conv weights (BN scale in), tap-major rows
        # tmask:  (9, 1, HWp)     per-tap boundary masks for the SAME padding
        # b2/a2:  (Cofin, 1)
        # o_ref:  (Nb, Cofin, HW) lane-dense NCHW output block
        x = x_ref[...]                                             # (Nb, Cin, HWp)

        # ---- all adaptive pools, all images: ONE batched matmul (Nb*Cin MXU rows) ----
        pooled = jnp.dot(x.reshape(Nb * Cin, HWp), pT_ref[...],
                         preferred_element_type=jnp.float32)       # (Nb*Cin, SPP)

        # ---- per-image 1x1 conv + BN + PReLU + branch select (tiny, unrolled) ----
        ys = []
        for i in range(Nb):
            y = jnp.dot(w1_ref[...], pooled[i * Cin:(i + 1) * Cin, :],
                        preferred_element_type=jnp.float32) + b1_ref[...]
            y = jnp.where(y > 0.0, y, a1_ref[...] * y)             # PReLU
            ys.append(y * bmask_ref[...])                          # branch select
        y_all = ys[0] if Nb == 1 else jnp.concatenate(ys, axis=0)  # (Nb*NBCo, SPP)

        # ---- all bilinear upsamples, all branches & images: ONE batched matmul ----
        up_all = jnp.dot(y_all, uT_ref[...],
                         preferred_element_type=jnp.float32)       # (Nb*NBCo, HWp)

        # ---- per-image bottleneck: 3x3 SAME conv (+BN+PReLU) on the implicit concat ----
        for i in range(Nb):
            cat = jnp.concatenate(
                [x[i], up_all[i * NBCo:(i + 1) * NBCo, :]], axis=0)   # (Ct, HWp)
            v = jnp.dot(wc_ref[...], cat,
                        preferred_element_type=jnp.float32)           # (9*Cofin, HWp)
            # 9 taps as lane rolls + boundary masks (XLU/VPU; no (HW,HW) matmuls),
            # accumulated into 3 independent partials to avoid a 9-deep add chain.
            parts = [None, None, None]
            for t in range(9):
                dy, dx = t // 3 - 1, t % 3 - 1
                s = dy * W + dx
                vt = v[t * Cofin:(t + 1) * Cofin, :]
                if s == 0:
                    term = vt
                else:
                    term = pltpu.roll(vt, shift=(-s) % HWp, axis=1) * tmask_ref[t]
                j = t % 3
                parts[j] = term if parts[j] is None else parts[j] + term
            out = (parts[0] + parts[1]) + (parts[2] + b2_ref[...])
            out = jnp.where(out > 0.0, out, a2_ref[...] * out)         # PReLU
            o_ref[i] = out[:, :HW]                                     # drop lane padding

    return kernel


# ------------------------------------- pallas wrapper -------------------------------- #
_ARG_ORDER = ["pT", "uT", "w1", "b1", "a1", "bmask", "wc", "tmask", "b2", "a2"]


def _const_spec(shape):
    # Grid-invariant constant: full block, single-buffered (no 2x resident VMEM).
    nd = len(shape)
    return pl.BlockSpec(shape, lambda n, _nd=nd: (0,) * _nd,
                        pipeline_mode=pl.Buffered(1))


@partial(jax.jit, static_argnames=("images_per_step",))
def psp_head_forward(x_nhwc, consts, images_per_step=None):
    """x_nhwc: (N, H, W, Cin) -- same input the PyTorch module's forward receives."""
    N, H, W, Cin = x_nhwc.shape
    HW = H * W
    HWp = _pad_hw(HW)
    NBCo = consts["w1"].shape[0]
    Cofin = consts["b2"].shape[0]
    nb = images_per_step if images_per_step is not None else min(N, 8)
    ng = pl.cdiv(N, nb)
    n_pad = ng * nb

    # The PyTorch module starts with x.permute((0, 3, 1, 2)); do the same, flatten the
    # spatial dims onto the lane axis and zero-pad them to a multiple of 128 lanes
    # (one fused XLA copy; negligible at this size -- see NOTE at top for production).
    x_cf = jnp.transpose(x_nhwc, (0, 3, 1, 2)).reshape(N, Cin, HW)
    x_cf = jnp.pad(x_cf, ((0, n_pad - N), (0, 0), (0, HWp - HW)))

    out = pl.pallas_call(
        _make_kernel(H, W, HWp, Cin, NBCo, Cofin, nb),
        out_shape=jax.ShapeDtypeStruct((n_pad, Cofin, HW), jnp.float32),
        grid_spec=pltpu.PrefetchScalarGridSpec(
            num_scalar_prefetch=0,
            grid=(ng,),
            in_specs=[pl.BlockSpec((nb, Cin, HWp), lambda n: (n, 0, 0))]
                     + [_const_spec(consts[k].shape) for k in _ARG_ORDER],
            out_specs=pl.BlockSpec((nb, Cofin, HW), lambda n: (n, 0, 0)),
        ),
        compiler_params=pltpu.CompilerParams(
            dimension_semantics=("parallel",),
        ),
    )(x_cf, *[consts[k] for k in _ARG_ORDER])
    if n_pad != N:
        out = out[:N]
    return out.reshape(N, Cofin, H, W)   # already NCHW; contiguous reshape only


# ---------------------------------- pure-JAX reference -------------------------------- #
def ref_forward(x, params, mats):
    N, H, W, Cin = x.shape
    HW = H * W
    outs = [x]
    for (P2, U2), br in zip(mats, params["ppm"]):
        P2j, U2j = jnp.asarray(P2), jnp.asarray(U2)
        pooled = jnp.einsum("ph,nhc->npc", P2j, x.reshape(N, HW, Cin))
        y = pooled @ br["w"] + br["b"]
        y = y * br["scale"] + br["shift"]
        y = jnp.where(y > 0.0, y, br["alpha"] * y)
        up = jnp.einsum("hp,npc->nhc", U2j, y).reshape(N, H, W, -1)
        outs.append(up)
    cat = jnp.concatenate(outs, axis=-1)
    bt = params["bott"]
    out = jax.lax.conv_general_dilated(
        cat, bt["w"], (1, 1), "SAME", dimension_numbers=("NHWC", "HWIO", "NHWC"))
    out = out + bt["b"]
    out = out * bt["scale"] + bt["shift"]
    out = jnp.where(out > 0.0, out, bt["alpha"] * out)
    return jnp.transpose(out, (0, 3, 1, 2))


# ------------------------------------- parameters ------------------------------------- #
def _bn_fold(kg, kb, km, kv, c):
    gamma = 1.0 + 0.1 * jax.random.normal(kg, (c,), jnp.float32)
    beta = 0.1 * jax.random.normal(kb, (c,), jnp.float32)
    mean = 0.1 * jax.random.normal(km, (c,), jnp.float32)
    var = 1.0 + 0.1 * jax.random.uniform(kv, (c,), jnp.float32)
    scale = gamma / jnp.sqrt(var + 1e-5)
    shift = beta - mean * scale
    return scale, shift


def init_params(key, input_dim, output_dims, final_output_dims, pool_scales):
    params = {"ppm": [], "bott": None}
    ct = input_dim + output_dims * len(pool_scales)
    for _ in pool_scales:
        key, k1, k2, k3, k4, k5, k6 = jax.random.split(key, 7)
        w = 0.1 * jax.random.normal(k1, (input_dim, output_dims), jnp.float32)
        b = 0.1 * jax.random.normal(k2, (output_dims,), jnp.float32)
        scale, shift = _bn_fold(k3, k4, k5, k6, output_dims)
        params["ppm"].append(dict(w=w, b=b, scale=scale, shift=shift,
                                  alpha=jnp.float32(0.25)))
    key, k1, k2, k3, k4, k5, k6 = jax.random.split(key, 7)
    w = 0.05 * jax.random.normal(k1, (3, 3, ct, final_output_dims), jnp.float32)  # HWIO
    b = 0.1 * jax.random.normal(k2, (final_output_dims,), jnp.float32)
    scale, shift = _bn_fold(k3, k4, k5, k6, final_output_dims)
    params["bott"] = dict(w=w, b=b, scale=scale, shift=shift, alpha=jnp.float32(0.25))
    return params


# ---------------------------------------- main ---------------------------------------- #
if __name__ == "__main__":
    N, H, W = 2, 12, 12
    input_dim, output_dims, final_output_dims = 8, 4, 8
    pool_scales = [1, 2, 3, 6]

    key = jax.random.PRNGKey(0)
    key, kx = jax.random.split(key)
    # Module input is NHWC (the PyTorch forward permutes (0, 3, 1, 2) first).
    x = jax.random.normal(kx, (N, H, W, input_dim), jnp.float32)
    params = init_params(key, input_dim, output_dims, final_output_dims, pool_scales)

    mats = build_branch_mats(H, W, pool_scales)
    consts = build_constants(params, mats, H, W)

    # Whole batch in one grid step at toy size (on v7x with larger N, use N//2 per step
    # so both TensorCores get a grid step).
    out = psp_head_forward(x, consts, images_per_step=N)
    out = jax.block_until_ready(out)
    assert out.shape == (N, final_output_dims, H, W)

    ref = jax.block_until_ready(ref_forward(x, params, mats))
    np.testing.assert_allclose(np.asarray(out), np.asarray(ref), rtol=1e-4, atol=1e-4)
    print("KERNEL_OK")
</pallas_src>

<mosaic_0001>
module attributes {stable_mosaic.version = 11 : i64} {
  func.func @kernel(%arg0: i32, %arg1: memref<2x8x256xf32, #tpu.memory_space<vmem>>, %arg2: memref<256x50xf32, #tpu.memory_space<vmem>>, %arg3: memref<50x256xf32, #tpu.memory_space<vmem>>, %arg4: memref<16x8xf32, #tpu.memory_space<vmem>>, %arg5: memref<16x1xf32, #tpu.memory_space<vmem>>, %arg6: memref<16x1xf32, #tpu.memory_space<vmem>>, %arg7: memref<16x50xf32, #tpu.memory_space<vmem>>, %arg8: memref<72x24xf32, #tpu.memory_space<vmem>>, %arg9: memref<9x1x256xf32, #tpu.memory_space<vmem>>, %arg10: memref<8x1xf32, #tpu.memory_space<vmem>>, %arg11: memref<8x1xf32, #tpu.memory_space<vmem>>, %arg12: memref<2x8x144xf32, #tpu.memory_space<vmem>>) attributes {dimension_semantics = [#tpu.dimension_semantics<parallel>], iteration_bounds = array<i64: 1>, scalar_prefetch = 0 : i64, scratch_operands = 0 : i64, tpu.core_type = #tpu.core_type<tc>, window_params = [{transform_indices = @transform_0, window_bounds = array<i64: 2, 8, 256>}, {pipeline_mode = #tpu.pipeline_mode<synchronous>, transform_indices = @transform_1, window_bounds = array<i64: 256, 50>}, {pipeline_mode = #tpu.pipeline_mode<synchronous>, transform_indices = @transform_2, window_bounds = array<i64: 50, 256>}, {pipeline_mode = #tpu.pipeline_mode<synchronous>, transform_indices = @transform_3, window_bounds = array<i64: 16, 8>}, {pipeline_mode = #tpu.pipeline_mode<synchronous>, transform_indices = @transform_4, window_bounds = array<i64: 16, 1>}, {pipeline_mode = #tpu.pipeline_mode<synchronous>, transform_indices = @transform_5, window_bounds = array<i64: 16, 1>}, {pipeline_mode = #tpu.pipeline_mode<synchronous>, transform_indices = @transform_6, window_bounds = array<i64: 16, 50>}, {pipeline_mode = #tpu.pipeline_mode<synchronous>, transform_indices = @transform_7, window_bounds = array<i64: 72, 24>}, {pipeline_mode = #tpu.pipeline_mode<synchronous>, transform_indices = @transform_8, window_bounds = array<i64: 9, 1, 256>}, {pipeline_mode = #tpu.pipeline_mode<synchronous>, transform_indices = @transform_9, window_bounds = array<i64: 8, 1>}, {pipeline_mode = #tpu.pipeline_mode<synchronous>, transform_indices = @transform_10, window_bounds = array<i64: 8, 1>}, {transform_indices = @transform_11, window_bounds = array<i64: 2, 8, 144>}]} {
    %c0 = arith.constant 0 : index
    %c0_0 = arith.constant 0 : index
    %c0_1 = arith.constant 0 : index
    %0 = vector.load %arg1[%c0, %c0_0, %c0_1] : memref<2x8x256xf32, #tpu.memory_space<vmem>>, vector<2x8x256xf32>
    %1 = vector.shape_cast %0 : vector<2x8x256xf32> to vector<16x256xf32>
    %c0_2 = arith.constant 0 : index
    %c0_3 = arith.constant 0 : index
    %2 = vector.load %arg2[%c0_2, %c0_3] : memref<256x50xf32, #tpu.memory_space<vmem>>, vector<256x50xf32>
    %cst = arith.constant dense<0.000000e+00> : vector<16x50xf32>
    %3 = tpu.matmul %1, %2, %cst {dimension_numbers = #tpu.dot_dimension_numbers<[1], [0], [0], [1], [0, 0, 1, 1], [], []>} : vector<16x256xf32>, vector<256x50xf32>, vector<16x50xf32> -> vector<16x50xf32>
    %c0_4 = arith.constant 0 : index
    %c0_5 = arith.constant 0 : index
    %4 = vector.load %arg4[%c0_4, %c0_5] : memref<16x8xf32, #tpu.memory_space<vmem>>, vector<16x8xf32>
    %5 = vector.extract_strided_slice %3 {offsets = [0, 0], sizes = [8, 50], strides = [1, 1]} : vector<16x50xf32> to vector<8x50xf32>
    %cst_6 = arith.constant dense<0.000000e+00> : vector<16x50xf32>
    %6 = tpu.matmul %4, %5, %cst_6 {dimension_numbers = #tpu.dot_dimension_numbers<[1], [0], [0], [1], [0, 0, 1, 1], [], []>} : vector<16x8xf32>, vector<8x50xf32>, vector<16x50xf32> -> vector<16x50xf32>
    %c0_7 = arith.constant 0 : index
    %c0_8 = arith.constant 0 : index
    %7 = vector.load %arg5[%c0_7, %c0_8] : memref<16x1xf32, #tpu.memory_space<vmem>>, vector<16x1xf32>
    %8 = vector.broadcast %7 : vector<16x1xf32> to vector<16x50xf32>
    %9 = arith.addf %6, %8 : vector<16x50xf32>
    %cst_9 = arith.constant 0.000000e+00 : f32
    %10 = vector.broadcast %cst_9 : f32 to vector<16x50xf32>
    %11 = arith.cmpf ogt, %9, %10 : vector<16x50xf32>
    %c0_10 = arith.constant 0 : index
    %c0_11 = arith.constant 0 : index
    %12 = vector.load %arg6[%c0_10, %c0_11] : memref<16x1xf32, #tpu.memory_space<vmem>>, vector<16x1xf32>
    %13 = vector.broadcast %12 : vector<16x1xf32> to vector<16x50xf32>
    %14 = arith.mulf %13, %9 : vector<16x50xf32>
    %15 = arith.select %11, %9, %14 : vector<16x50xi1>, vector<16x50xf32>
    %c0_12 = arith.constant 0 : index
    %c0_13 = arith.constant 0 : index
    %16 = vector.load %arg7[%c0_12, %c0_13] : memref<16x50xf32, #tpu.memory_space<vmem>>, vector<16x50xf32>
    %17 = arith.mulf %15, %16 : vector<16x50xf32>
    %c0_14 = arith.constant 0 : index
    %c0_15 = arith.constant 0 : index
    %18 = vector.load %arg4[%c0_14, %c0_15] : memref<16x8xf32, #tpu.memory_space<vmem>>, vector<16x8xf32>
    %19 = vector.extract_strided_slice %3 {offsets = [8, 0], sizes = [8, 50], strides = [1, 1]} : vector<16x50xf32> to vector<8x50xf32>
    %cst_16 = arith.constant dense<0.000000e+00> : vector<16x50xf32>
    %20 = tpu.matmul %18, %19, %cst_16 {dimension_numbers = #tpu.dot_dimension_numbers<[1], [0], [0], [1], [0, 0, 1, 1], [], []>} : vector<16x8xf32>, vector<8x50xf32>, vector<16x50xf32> -> vector<16x50xf32>
    %c0_17 = arith.constant 0 : index
    %c0_18 = arith.constant 0 : index
    %21 = vector.load %arg5[%c0_17, %c0_18] : memref<16x1xf32, #tpu.memory_space<vmem>>, vector<16x1xf32>
    %22 = vector.broadcast %21 : vector<16x1xf32> to vector<16x50xf32>
    %23 = arith.addf %20, %22 : vector<16x50xf32>
    %cst_19 = arith.constant 0.000000e+00 : f32
    %24 = vector.broadcast %cst_19 : f32 to vector<16x50xf32>
    %25 = arith.cmpf ogt, %23, %24 : vector<16x50xf32>
    %c0_20 = arith.constant 0 : index
    %c0_21 = arith.constant 0 : index
    %26 = vector.load %arg6[%c0_20, %c0_21] : memref<16x1xf32, #tpu.memory_space<vmem>>, vector<16x1xf32>
    %27 = vector.broadcast %26 : vector<16x1xf32> to vector<16x50xf32>
    %28 = arith.mulf %27, %23 : vector<16x50xf32>
    %29 = arith.select %25, %23, %28 : vector<16x50xi1>, vector<16x50xf32>
    %c0_22 = arith.constant 0 : index
    %c0_23 = arith.constant 0 : index
    %30 = vector.load %arg7[%c0_22, %c0_23] : memref<16x50xf32, #tpu.memory_space<vmem>>, vector<16x50xf32>
    %31 = arith.mulf %29, %30 : vector<16x50xf32>
    %32 = tpu.concatenate %17, %31 in 0 : vector<16x50xf32>, vector<16x50xf32> -> vector<32x50xf32>
    %c0_24 = arith.constant 0 : index
    %c0_25 = arith.constant 0 : index
    %33 = vector.load %arg3[%c0_24, %c0_25] : memref<50x256xf32, #tpu.memory_space<vmem>>, vector<50x256xf32>
    %cst_26 = arith.constant dense<0.000000e+00> : vector<32x256xf32>
    %34 = tpu.matmul %32, %33, %cst_26 {dimension_numbers = #tpu.dot_dimension_numbers<[1], [0], [0], [1], [0, 0, 1, 1], [], []>} : vector<32x50xf32>, vector<50x256xf32>, vector<32x256xf32> -> vector<32x256xf32>
    %35 = vector.extract_strided_slice %0 {offsets = [0, 0, 0], sizes = [1, 8, 256], strides = [1, 1, 1]} : vector<2x8x256xf32> to vector<1x8x256xf32>
    %36 = vector.shape_cast %35 : vector<1x8x256xf32> to vector<8x256xf32>
    %37 = vector.extract_strided_slice %34 {offsets = [0, 0], sizes = [16, 256], strides = [1, 1]} : vector<32x256xf32> to vector<16x256xf32>
    %38 = tpu.concatenate %36, %37 in 0 : vector<8x256xf32>, vector<16x256xf32> -> vector<24x256xf32>
    %c0_27 = arith.constant 0 : index
    %c0_28 = arith.constant 0 : index
    %39 = vector.load %arg8[%c0_27, %c0_28] : memref<72x24xf32, #tpu.memory_space<vmem>>, vector<72x24xf32>
    %cst_29 = arith.constant dense<0.000000e+00> : vector<72x256xf32>
    %40 = tpu.matmul %39, %38, %cst_29 {dimension_numbers = #tpu.dot_dimension_numbers<[1], [0], [0], [1], [0, 0, 1, 1], [], []>} : vector<72x24xf32>, vector<24x256xf32>, vector<72x256xf32> -> vector<72x256xf32>
    %41 = vector.extract_strided_slice %40 {offsets = [0, 0], sizes = [8, 256], strides = [1, 1]} : vector<72x256xf32> to vector<8x256xf32>
    %c13_i32 = arith.constant 13 : i32
    %42 = tpu.dynamic_rotate %41 by %c13_i32 dim 1 : vector<8x256xf32>, i32 -> vector<8x256xf32>
    %c0_30 = arith.constant 0 : index
    %c0_31 = arith.constant 0 : index
    %c0_32 = arith.constant 0 : index
    %43 = vector.load %arg9[%c0_30, %c0_31, %c0_32] : memref<9x1x256xf32, #tpu.memory_space<vmem>>, vector<1x1x256xf32>
    %44 = vector.shape_cast %43 : vector<1x1x256xf32> to vector<1x256xf32>
    %45 = vector.broadcast %44 : vector<1x256xf32> to vector<8x256xf32>
    %46 = arith.mulf %42, %45 : vector<8x256xf32>
    %47 = vector.extract_strided_slice %40 {offsets = [8, 0], sizes = [8, 256], strides = [1, 1]} : vector<72x256xf32> to vector<8x256xf32>
    %c12_i32 = arith.constant 12 : i32
    %48 = tpu.dynamic_rotate %47 by %c12_i32 dim 1 : vector<8x256xf32>, i32 -> vector<8x256xf32>
    %c1 = arith.constant 1 : index
    %c0_33 = arith.constant 0 : index
    %c0_34 = arith.constant 0 : index
    %49 = vector.load %arg9[%c1, %c0_33, %c0_34] : memref<9x1x256xf32, #tpu.memory_space<vmem>>, vector<1x1x256xf32>
    %50 = vector.shape_cast %49 : vector<1x1x256xf32> to vector<1x256xf32>
    %51 = vector.broadcast %50 : vector<1x256xf32> to vector<8x256xf32>
    %52 = arith.mulf %48, %51 : vector<8x256xf32>
    %53 = vector.extract_strided_slice %40 {offsets = [16, 0], sizes = [8, 256], strides = [1, 1]} : vector<72x256xf32> to vector<8x256xf32>
    %c11_i32 = arith.constant 11 : i32
    %54 = tpu.dynamic_rotate %53 by %c11_i32 dim 1 : vector<8x256xf32>, i32 -> vector<8x256xf32>
    %c2 = arith.constant 2 : index
    %c0_35 = arith.constant 0 : index
    %c0_36 = arith.constant 0 : index
    %55 = vector.load %arg9[%c2, %c0_35, %c0_36] : memref<9x1x256xf32, #tpu.memory_space<vmem>>, vector<1x1x256xf32>
    %56 = vector.shape_cast %55 : vector<1x1x256xf32> to vector<1x256xf32>
    %57 = vector.broadcast %56 : vector<1x256xf32> to vector<8x256xf32>
    %58 = arith.mulf %54, %57 : vector<8x256xf32>
    %59 = vector.extract_strided_slice %40 {offsets = [24, 0], sizes = [8, 256], strides = [1, 1]} : vector<72x256xf32> to vector<8x256xf32>
    %c1_i32 = arith.constant 1 : i32
    %60 = tpu.dynamic_rotate %59 by %c1_i32 dim 1 : vector<8x256xf32>, i32 -> vector<8x256xf32>
    %c3 = arith.constant 3 : index
    %c0_37 = arith.constant 0 : index
    %c0_38 = arith.constant 0 : index
    %61 = vector.load %arg9[%c3, %c0_37, %c0_38] : memref<9x1x256xf32, #tpu.memory_space<vmem>>, vector<1x1x256xf32>
    %62 = vector.shape_cast %61 : vector<1x1x256xf32> to vector<1x256xf32>
    %63 = vector.broadcast %62 : vector<1x256xf32> to vector<8x256xf32>
    %64 = arith.mulf %60, %63 : vector<8x256xf32>
    %65 = arith.addf %46, %64 : vector<8x256xf32>
    %66 = vector.extract_strided_slice %40 {offsets = [32, 0], sizes = [8, 256], strides = [1, 1]} : vector<72x256xf32> to vector<8x256xf32>
    %67 = arith.addf %52, %66 : vector<8x256xf32>
    %68 = vector.extract_strided_slice %40 {offsets = [40, 0], sizes = [8, 256], strides = [1, 1]} : vector<72x256xf32> to vector<8x256xf32>
    %c255_i32 = arith.constant 255 : i32
    %69 = tpu.dynamic_rotate %68 by %c255_i32 dim 1 : vector<8x256xf32>, i32 -> vector<8x256xf32>
    %c5 = arith.constant 5 : index
    %c0_39 = arith.constant 0 : index
    %c0_40 = arith.constant 0 : index
    %70 = vector.load %arg9[%c5, %c0_39, %c0_40] : memref<9x1x256xf32, #tpu.memory_space<vmem>>, vector<1x1x256xf32>
    %71 = vector.shape_cast %70 : vector<1x1x256xf32> to vector<1x256xf32>
    %72 = vector.broadcast %71 : vector<1x256xf32> to vector<8x256xf32>
    %73 = arith.mulf %69, %72 : vector<8x256xf32>
    %74 = arith.addf %58, %73 : vector<8x256xf32>
    %75 = vector.extract_strided_slice %40 {offsets = [48, 0], sizes = [8, 256], strides = [1, 1]} : vector<72x256xf32> to vector<8x256xf32>
    %c245_i32 = arith.constant 245 : i32
    %76 = tpu.dynamic_rotate %75 by %c245_i32 dim 1 : vector<8x256xf32>, i32 -> vector<8x256xf32>
    %c6 = arith.constant 6 : index
    %c0_41 = arith.constant 0 : index
    %c0_42 = arith.constant 0 : index
    %77 = vector.load %arg9[%c6, %c0_41, %c0_42] : memref<9x1x256xf32, #tpu.memory_space<vmem>>, vector<1x1x256xf32>
    %78 = vector.shape_cast %77 : vector<1x1x256xf32> to vector<1x256xf32>
    %79 = vector.broadcast %78 : vector<1x256xf32> to vector<8x256xf32>
    %80 = arith.mulf %76, %79 : vector<8x256xf32>
    %81 = arith.addf %65, %80 : vector<8x256xf32>
    %82 = vector.extract_strided_slice %40 {offsets = [56, 0], sizes = [8, 256], strides = [1, 1]} : vector<72x256xf32> to vector<8x256xf32>
    %c244_i32 = arith.constant 244 : i32
    %83 = tpu.dynamic_rotate %82 by %c244_i32 dim 1 : vector<8x256xf32>, i32 -> vector<8x256xf32>
    %c7 = arith.constant 7 : index
    %c0_43 = arith.constant 0 : index
    %c0_44 = arith.constant 0 : index
    %84 = vector.load %arg9[%c7, %c0_43, %c0_44] : memref<9x1x256xf32, #tpu.memory_space<vmem>>, vector<1x1x256xf32>
    %85 = vector.shape_cast %84 : vector<1x1x256xf32> to vector<1x256xf32>
    %86 = vector.broadcast %85 : vector<1x256xf32> to vector<8x256xf32>
    %87 = arith.mulf %83, %86 : vector<8x256xf32>
    %88 = arith.addf %67, %87 : vector<8x256xf32>
    %89 = vector.extract_strided_slice %40 {offsets = [64, 0], sizes = [8, 256], strides = [1, 1]} : vector<72x256xf32> to vector<8x256xf32>
    %c243_i32 = arith.constant 243 : i32
    %90 = tpu.dynamic_rotate %89 by %c243_i32 dim 1 : vector<8x256xf32>, i32 -> vector<8x256xf32>
    %c8 = arith.constant 8 : index
    %c0_45 = arith.constant 0 : index
    %c0_46 = arith.constant 0 : index
    %91 = vector.load %arg9[%c8, %c0_45, %c0_46] : memref<9x1x256xf32, #tpu.memory_space<vmem>>, vector<1x1x256xf32>
    %92 = vector.shape_cast %91 : vector<1x1x256xf32> to vector<1x256xf32>
    %93 = vector.broadcast %92 : vector<1x256xf32> to vector<8x256xf32>
    %94 = arith.mulf %90, %93 : vector<8x256xf32>
    %95 = arith.addf %74, %94 : vector<8x256xf32>
    %96 = arith.addf %81, %88 : vector<8x256xf32>
    %c0_47 = arith.constant 0 : index
    %c0_48 = arith.constant 0 : index
    %97 = vector.load %arg10[%c0_47, %c0_48] : memref<8x1xf32, #tpu.memory_space<vmem>>, vector<8x1xf32>
    %98 = vector.broadcast %97 : vector<8x1xf32> to vector<8x256xf32>
    %99 = arith.addf %95, %98 : vector<8x256xf32>
    %100 = arith.addf %96, %99 : vector<8x256xf32>
    %cst_49 = arith.constant 0.000000e+00 : f32
    %101 = vector.broadcast %cst_49 : f32 to vector<8x256xf32>
    %102 = arith.cmpf ogt, %100, %101 : vector<8x256xf32>
    %c0_50 = arith.constant 0 : index
    %c0_51 = arith.constant 0 : index
    %103 = vector.load %arg11[%c0_50, %c0_51] : memref<8x1xf32, #tpu.memory_space<vmem>>, vector<8x1xf32>
    %104 = vector.broadcast %103 : vector<8x1xf32> to vector<8x256xf32>
    %105 = arith.mulf %104, %100 : vector<8x256xf32>
    %106 = arith.select %102, %100, %105 : vector<8x256xi1>, vector<8x256xf32>
    %107 = vector.extract_strided_slice %106 {offsets = [0, 0], sizes = [8, 144], strides = [1, 1]} : vector<8x256xf32> to vector<8x144xf32>
    %c0_52 = arith.constant 0 : index
    %c0_53 = arith.constant 0 : index
    %c0_54 = arith.constant 0 : index
    %108 = vector.load %arg12[%c0_52, %c0_53, %c0_54] : memref<2x8x144xf32, #tpu.memory_space<vmem>>, vector<1x8x144xf32>
    %109 = vector.shape_cast %108 : vector<1x8x144xf32> to vector<8x144xf32>
    %110 = vector.shape_cast %107 : vector<8x144xf32> to vector<1x8x144xf32>
    tpu.vector_store %arg12[%c0_52, %c0_53, %c0_54], %110 {strides = array<i32>} : memref<2x8x144xf32, #tpu.memory_space<vmem>>, vector<1x8x144xf32>,
    %111 = vector.extract_strided_slice %0 {offsets = [1, 0, 0], sizes = [1, 8, 256], strides = [1, 1, 1]} : vector<2x8x256xf32> to vector<1x8x256xf32>
    %112 = vector.shape_cast %111 : vector<1x8x256xf32> to vector<8x256xf32>
    %113 = vector.extract_strided_slice %34 {offsets = [16, 0], sizes = [16, 256], strides = [1, 1]} : vector<32x256xf32> to vector<16x256xf32>
    %114 = tpu.concatenate %112, %113 in 0 : vector<8x256xf32>, vector<16x256xf32> -> vector<24x256xf32>
    %c0_55 = arith.constant 0 : index
    %c0_56 = arith.constant 0 : index
    %115 = vector.load %arg8[%c0_55, %c0_56] : memref<72x24xf32, #tpu.memory_space<vmem>>, vector<72x24xf32>
    %cst_57 = arith.constant dense<0.000000e+00> : vector<72x256xf32>
    %116 = tpu.matmul %115, %114, %cst_57 {dimension_numbers = #tpu.dot_dimension_numbers<[1], [0], [0], [1], [0, 0, 1, 1], [], []>} : vector<72x24xf32>, vector<24x256xf32>, vector<72x256xf32> -> vector<72x256xf32>
    %117 = vector.extract_strided_slice %116 {offsets = [0, 0], sizes = [8, 256], strides = [1, 1]} : vector<72x256xf32> to vector<8x256xf32>
    %c13_i32_58 = arith.constant 13 : i32
    %118 = tpu.dynamic_rotate %117 by %c13_i32_58 dim 1 : vector<8x256xf32>, i32 -> vector<8x256xf32>
    %c0_59 = arith.constant 0 : index
    %c0_60 = arith.constant 0 : index
    %c0_61 = arith.constant 0 : index
    %119 = vector.load %arg9[%c0_59, %c0_60, %c0_61] : memref<9x1x256xf32, #tpu.memory_space<vmem>>, vector<1x1x256xf32>
    %120 = vector.shape_cast %119 : vector<1x1x256xf32> to vector<1x256xf32>
    %121 = vector.broadcast %120 : vector<1x256xf32> to vector<8x256xf32>
    %122 = arith.mulf %118, %121 : vector<8x256xf32>
    %123 = vector.extract_strided_slice %116 {offsets = [8, 0], sizes = [8, 256], strides = [1, 1]} : vector<72x256xf32> to vector<8x256xf32>
    %c12_i32_62 = arith.constant 12 : i32
    %124 = tpu.dynamic_rotate %123 by %c12_i32_62 dim 1 : vector<8x256xf32>, i32 -> vector<8x256xf32>
    %c1_63 = arith.constant 1 : index
    %c0_64 = arith.constant 0 : index
    %c0_65 = arith.constant 0 : index
    %125 = vector.load %arg9[%c1_63, %c0_64, %c0_65] : memref<9x1x256xf32, #tpu.memory_space<vmem>>, vector<1x1x256xf32>
    %126 = vector.shape_cast %125 : vector<1x1x256xf32> to vector<1x256xf32>
    %127 = vector.broadcast %126 : vector<1x256xf32> to vector<8x256xf32>
    %128 = arith.mulf %124, %127 : vector<8x256xf32>
    %129 = vector.extract_strided_slice %116 {offsets = [16, 0], sizes = [8, 256], strides = [1, 1]} : vector<72x256xf32> to vector<8x256xf32>
    %c11_i32_66 = arith.constant 11 : i32
    %130 = tpu.dynamic_rotate %129 by %c11_i32_66 dim 1 : vector<8x256xf32>, i32 -> vector<8x256xf32>
    %c2_67 = arith.constant 2 : index
    %c0_68 = arith.constant 0 : index
    %c0_69 = arith.constant 0 : index
    %131 = vector.load %arg9[%c2_67, %c0_68, %c0_69] : memref<9x1x256xf32, #tpu.memory_space<vmem>>, vector<1x1x256xf32>
    %132 = vector.shape_cast %131 : vector<1x1x256xf32> to vector<1x256xf32>
    %133 = vector.broadcast %132 : vector<1x256xf32> to vector<8x256xf32>
    %134 = arith.mulf %130, %133 : vector<8x256xf32>
    %135 = vector.extract_strided_slice %116 {offsets = [24, 0], sizes = [8, 256], strides = [1, 1]} : vector<72x256xf32> to vector<8x256xf32>
    %c1_i32_70 = arith.constant 1 : i32
    %136 = tpu.dynamic_rotate %135 by %c1_i32_70 dim 1 : vector<8x256xf32>, i32 -> vector<8x256xf32>
    %c3_71 = arith.constant 3 : index
    %c0_72 = arith.constant 0 : index
    %c0_73 = arith.constant 0 : index
    %137 = vector.load %arg9[%c3_71, %c0_72, %c0_73] : memref<9x1x256xf32, #tpu.memory_space<vmem>>, vector<1x1x256xf32>
    %138 = vector.shape_cast %137 : vector<1x1x256xf32> to vector<1x256xf32>
    %139 = vector.broadcast %138 : vector<1x256xf32> to vector<8x256xf32>
    %140 = arith.mulf %136, %139 : vector<8x256xf32>
    %141 = arith.addf %122, %140 : vector<8x256xf32>
    %142 = vector.extract_strided_slice %116 {offsets = [32, 0], sizes = [8, 256], strides = [1, 1]} : vector<72x256xf32> to vector<8x256xf32>
    %143 = arith.addf %128, %142 : vector<8x256xf32>
    %144 = vector.extract_strided_slice %116 {offsets = [40, 0], sizes = [8, 256], strides = [1, 1]} : vector<72x256xf32> to vector<8x256xf32>
    %c255_i32_74 = arith.constant 255 : i32
    %145 = tpu.dynamic_rotate %144 by %c255_i32_74 dim 1 : vector<8x256xf32>, i32 -> vector<8x256xf32>
    %c5_75 = arith.constant 5 : index
    %c0_76 = arith.constant 0 : index
    %c0_77 = arith.constant 0 : index
    %146 = vector.load %arg9[%c5_75, %c0_76, %c0_77] : memref<9x1x256xf32, #tpu.memory_space<vmem>>, vector<1x1x256xf32>
    %147 = vector.shape_cast %146 : vector<1x1x256xf32> to vector<1x256xf32>
    %148 = vector.broadcast %147 : vector<1x256xf32> to vector<8x256xf32>
    %149 = arith.mulf %145, %148 : vector<8x256xf32>
    %150 = arith.addf %134, %149 : vector<8x256xf32>
    %151 = vector.extract_strided_slice %116 {offsets = [48, 0], sizes = [8, 256], strides = [1, 1]} : vector<72x256xf32> to vector<8x256xf32>
    %c245_i32_78 = arith.constant 245 : i32
    %152 = tpu.dynamic_rotate %151 by %c245_i32_78 dim 1 : vector<8x256xf32>, i32 -> vector<8x256xf32>
    %c6_79 = arith.constant 6 : index
    %c0_80 = arith.constant 0 : index
    %c0_81 = arith.constant 0 : index
    %153 = vector.load %arg9[%c6_79, %c0_80, %c0_81] : memref<9x1x256xf32, #tpu.memory_space<vmem>>, vector<1x1x256xf32>
    %154 = vector.shape_cast %153 : vector<1x1x256xf32> to vector<1x256xf32>
    %155 = vector.broadcast %154 : vector<1x256xf32> to vector<8x256xf32>
    %156 = arith.mulf %152, %155 : vector<8x256xf32>
    %157 = arith.addf %141, %156 : vector<8x256xf32>
    %158 = vector.extract_strided_slice %116 {offsets = [56, 0], sizes = [8, 256], strides = [1, 1]} : vector<72x256xf32> to vector<8x256xf32>
    %c244_i32_82 = arith.constant 244 : i32
    %159 = tpu.dynamic_rotate %158 by %c244_i32_82 dim 1 : vector<8x256xf32>, i32 -> vector<8x256xf32>
    %c7_83 = arith.constant 7 : index
    %c0_84 = arith.constant 0 : index
    %c0_85 = arith.constant 0 : index
    %160 = vector.load %arg9[%c7_83, %c0_84, %c0_85] : memref<9x1x256xf32, #tpu.memory_space<vmem>>, vector<1x1x256xf32>
    %161 = vector.shape_cast %160 : vector<1x1x256xf32> to vector<1x256xf32>
    %162 = vector.broadcast %161 : vector<1x256xf32> to vector<8x256xf32>
    %163 = arith.mulf %159, %162 : vector<8x256xf32>
    %164 = arith.addf %143, %163 : vector<8x256xf32>
    %165 = vector.extract_strided_slice %116 {offsets = [64, 0], sizes = [8, 256], strides = [1, 1]} : vector<72x256xf32> to vector<8x256xf32>
    %c243_i32_86 = arith.constant 243 : i32
    %166 = tpu.dynamic_rotate %165 by %c243_i32_86 dim 1 : vector<8x256xf32>, i32 -> vector<8x256xf32>
    %c8_87 = arith.constant 8 : index
    %c0_88 = arith.constant 0 : index
    %c0_89 = arith.constant 0 : index
    %167 = vector.load %arg9[%c8_87, %c0_88, %c0_89] : memref<9x1x256xf32, #tpu.memory_space<vmem>>, vector<1x1x256xf32>
    %168 = vector.shape_cast %167 : vector<1x1x256xf32> to vector<1x256xf32>
    %169 = vector.broadcast %168 : vector<1x256xf32> to vector<8x256xf32>
    %170 = arith.mulf %166, %169 : vector<8x256xf32>
    %171 = arith.addf %150, %170 : vector<8x256xf32>
    %172 = arith.addf %157, %164 : vector<8x256xf32>
    %c0_90 = arith.constant 0 : index
    %c0_91 = arith.constant 0 : index
    %173 = vector.load %arg10[%c0_90, %c0_91] : memref<8x1xf32, #tpu.memory_space<vmem>>, vector<8x1xf32>
    %174 = vector.broadcast %173 : vector<8x1xf32> to vector<8x256xf32>
    %175 = arith.addf %171, %174 : vector<8x256xf32>
    %176 = arith.addf %172, %175 : vector<8x256xf32>
    %cst_92 = arith.constant 0.000000e+00 : f32
    %177 = vector.broadcast %cst_92 : f32 to vector<8x256xf32>
    %178 = arith.cmpf ogt, %176, %177 : vector<8x256xf32>
    %c0_93 = arith.constant 0 : index
    %c0_94 = arith.constant 0 : index
    %179 = vector.load %arg11[%c0_93, %c0_94] : memref<8x1xf32, #tpu.memory_space<vmem>>, vector<8x1xf32>
    %180 = vector.broadcast %179 : vector<8x1xf32> to vector<8x256xf32>
    %181 = arith.mulf %180, %176 : vector<8x256xf32>
    %182 = arith.select %178, %176, %181 : vector<8x256xi1>, vector<8x256xf32>
    %183 = vector.extract_strided_slice %182 {offsets = [0, 0], sizes = [8, 144], strides = [1, 1]} : vector<8x256xf32> to vector<8x144xf32>
    %c1_95 = arith.constant 1 : index
    %c0_96 = arith.constant 0 : index
    %c0_97 = arith.constant 0 : index
    %184 = vector.load %arg12[%c1_95, %c0_96, %c0_97] : memref<2x8x144xf32, #tpu.memory_space<vmem>>, vector<1x8x144xf32>
    %185 = vector.shape_cast %184 : vector<1x8x144xf32> to vector<8x144xf32>
    %186 = vector.shape_cast %183 : vector<8x144xf32> to vector<1x8x144xf32>
    tpu.vector_store %arg12[%c1_95, %c0_96, %c0_97], %186 {strides = array<i32>} : memref<2x8x144xf32, #tpu.memory_space<vmem>>, vector<1x8x144xf32>,
    return
  }
  func.func @transform_0(%arg0: i32) -> (i32, i32, i32) {
    %c0_i32 = arith.constant 0 : i32
    %c0_i32_0 = arith.constant 0 : i32
    %c0_i32_1 = arith.constant 0 : i32
    return %arg0, %c0_i32, %c0_i32_0 : i32, i32, i32
  }
  func.func @transform_1(%arg0: i32) -> (i32, i32) {
    %c0_i32 = arith.constant 0 : i32
    %c0_i32_0 = arith.constant 0 : i32
    %c0_i32_1 = arith.constant 0 : i32
    return %c0_i32, %c0_i32_0 : i32, i32
  }
  func.func @transform_2(%arg0: i32) -> (i32, i32) {
    %c0_i32 = arith.constant 0 : i32
    %c0_i32_0 = arith.constant 0 : i32
    %c0_i32_1 = arith.constant 0 : i32
    return %c0_i32, %c0_i32_0 : i32, i32
  }
  func.func @transform_3(%arg0: i32) -> (i32, i32) {
    %c0_i32 = arith.constant 0 : i32
    %c0_i32_0 = arith.constant 0 : i32
    %c0_i32_1 = arith.constant 0 : i32
    return %c0_i32, %c0_i32_0 : i32, i32
  }
  func.func @transform_4(%arg0: i32) -> (i32, i32) {
    %c0_i32 = arith.constant 0 : i32
    %c0_i32_0 = arith.constant 0 : i32
    %c0_i32_1 = arith.constant 0 : i32
    return %c0_i32, %c0_i32_0 : i32, i32
  }
  func.func @transform_5(%arg0: i32) -> (i32, i32) {
    %c0_i32 = arith.constant 0 : i32
    %c0_i32_0 = arith.constant 0 : i32
    %c0_i32_1 = arith.constant 0 : i32
    return %c0_i32, %c0_i32_0 : i32, i32
  }
  func.func @transform_6(%arg0: i32) -> (i32, i32) {
    %c0_i32 = arith.constant 0 : i32
    %c0_i32_0 = arith.constant 0 : i32
    %c0_i32_1 = arith.constant 0 : i32
    return %c0_i32, %c0_i32_0 : i32, i32
  }
  func.func @transform_7(%arg0: i32) -> (i32, i32) {
    %c0_i32 = arith.constant 0 : i32
    %c0_i32_0 = arith.constant 0 : i32
    %c0_i32_1 = arith.constant 0 : i32
    return %c0_i32, %c0_i32_0 : i32, i32
  }
  func.func @transform_8(%arg0: i32) -> (i32, i32, i32) {
    %c0_i32 = arith.constant 0 : i32
    %c0_i32_0 = arith.constant 0 : i32
    %c0_i32_1 = arith.constant 0 : i32
    %c0_i32_2 = arith.constant 0 : i32
    return %c0_i32, %c0_i32_0, %c0_i32_1 : i32, i32, i32
  }
  func.func @transform_9(%arg0: i32) -> (i32, i32) {
    %c0_i32 = arith.constant 0 : i32
    %c0_i32_0 = arith.constant 0 : i32
    %c0_i32_1 = arith.constant 0 : i32
    return %c0_i32, %c0_i32_0 : i32, i32
  }
  func.func @transform_10(%arg0: i32) -> (i32, i32) {
    %c0_i32 = arith.constant 0 : i32
    %c0_i32_0 = arith.constant 0 : i32
    %c0_i32_1 = arith.constant 0 : i32
    return %c0_i32, %c0_i32_0 : i32, i32
  }
  func.func @transform_11(%arg0: i32) -> (i32, i32, i32) {
    %c0_i32 = arith.constant 0 : i32
    %c0_i32_0 = arith.constant 0 : i32
    %c0_i32_1 = arith.constant 0 : i32
    return %arg0, %c0_i32, %c0_i32_0 : i32, i32, i32
  }
}

</mosaic_0001>

<llo_original>
// kernel: psp_head_forward.1
$region0: #{psp_head_forward.1}
  #allocation0 [shape = 'u32[]', space=smem, size = 0x4, offset = 0x4, fixed_abs, tag = 'smem constant byte address 0x4 - core index']
  #allocation1 [shape = 'u32[144,128]{1,0:T(1,128)}', space=vmem, size = 0x12000, scoped, tag = 'internal scratch']
  %s0 = inlined_call_operand.vmem [shape: f32[2,8,256], index: 0, kind: input, shape index: {}]
  %s1 = inlined_call_operand.vmem [shape: f32[256,50], index: 1, kind: input, shape index: {}]
  %s2 = inlined_call_operand.vmem [shape: f32[50,256], index: 2, kind: input, shape index: {}]
  %s3 = inlined_call_operand.vmem [shape: f32[16,8], index: 3, kind: input, shape index: {}]
  %s4 = inlined_call_operand.vmem [shape: f32[16,1], index: 4, kind: input, shape index: {}]
  %s5 = inlined_call_operand.vmem [shape: f32[16,1], index: 5, kind: input, shape index: {}]
  %s6 = inlined_call_operand.vmem [shape: f32[16,50], index: 6, kind: input, shape index: {}]
  %s7 = inlined_call_operand.vmem [shape: f32[72,24], index: 7, kind: input, shape index: {}]
  %s8 = inlined_call_operand.vmem [shape: f32[9,1,256], index: 8, kind: input, shape index: {}]
  %s9 = inlined_call_operand.vmem [shape: f32[8,1], index: 9, kind: input, shape index: {}]
  %s10 = inlined_call_operand.vmem [shape: f32[8,1], index: 10, kind: input, shape index: {}]
  %s11 = inlined_call_operand.vmem [shape: f32[2,8,144], index: 11, kind: output, shape index: {}]
  %s12 = sld [smem:[#allocation0]]
  $region54: #{psp_head_forward.1} parent=0
    _
  %s14 = ssub.s32 1, %s12
  %s15 = scalar_select 0, %s14, %s12
  // Predicated region
  $region2: #{psp_head_forward.1} parent=0 // pred_check
    _
  $region3: #{psp_head_forward.1} parent=0 // pred_check_branch
    %17 = sbr.rel (0) target = $region5
  $region4: #{psp_head_forward.1} parent=0 // pred_region
    _
  $region5: #{psp_head_forward.1} parent=0 // pred_fallthru
    _
  // Predicated region
  $region6: #{psp_head_forward.1} parent=0 // pred_check
    _
  $region7: #{psp_head_forward.1} parent=0 // pred_check_branch
    %19 = sbr.rel (0) target = $region9
  $region8: #{psp_head_forward.1} parent=0 // pred_region
    _
  $region9: #{psp_head_forward.1} parent=0 // pred_fallthru
    _
  // Predicated region
  $region10: #{psp_head_forward.1} parent=0 // pred_check
    _
  $region11: #{psp_head_forward.1} parent=0 // pred_check_branch
    %21 = sbr.rel (0) target = $region13
  $region12: #{psp_head_forward.1} parent=0 // pred_region
    _
  $region13: #{psp_head_forward.1} parent=0 // pred_fallthru
    _
  // Predicated region
  $region14: #{psp_head_forward.1} parent=0 // pred_check
    _
  $region15: #{psp_head_forward.1} parent=0 // pred_check_branch
    %23 = sbr.rel (0) target = $region17
  $region16: #{psp_head_forward.1} parent=0 // pred_region
    _
  $region17: #{psp_head_forward.1} parent=0 // pred_fallthru
    _
  // Predicated region
  $region18: #{psp_head_forward.1} parent=0 // pred_check
    _
  $region19: #{psp_head_forward.1} parent=0 // pred_check_branch
    %25 = sbr.rel (0) target = $region21
  $region20: #{psp_head_forward.1} parent=0 // pred_region
    _
  $region21: #{psp_head_forward.1} parent=0 // pred_fallthru
    _
  // Predicated region
  $region22: #{psp_head_forward.1} parent=0 // pred_check
    _
  $region23: #{psp_head_forward.1} parent=0 // pred_check_branch
    %27 = sbr.rel (0) target = $region25
  $region24: #{psp_head_forward.1} parent=0 // pred_region
    _
  $region25: #{psp_head_forward.1} parent=0 // pred_fallthru
    _
  // Predicated region
  $region26: #{psp_head_forward.1} parent=0 // pred_check
    _
  $region27: #{psp_head_forward.1} parent=0 // pred_check_branch
    %29 = sbr.rel (0) target = $region29
  $region28: #{psp_head_forward.1} parent=0 // pred_region
    _
  $region29: #{psp_head_forward.1} parent=0 // pred_fallthru
    _
  // Predicated region
  $region30: #{psp_head_forward.1} parent=0 // pred_check
    _
  $region31: #{psp_head_forward.1} parent=0 // pred_check_branch
    %31 = sbr.rel (0) target = $region33
  $region32: #{psp_head_forward.1} parent=0 // pred_region
    _
  $region33: #{psp_head_forward.1} parent=0 // pred_fallthru
    _
  // Predicated region
  $region34: #{psp_head_forward.1} parent=0 // pred_check
    _
  $region35: #{psp_head_forward.1} parent=0 // pred_check_branch
    %33 = sbr.rel (0) target = $region37
  $region36: #{psp_head_forward.1} parent=0 // pred_region
    _
  $region37: #{psp_head_forward.1} parent=0 // pred_fallthru
    _
  // Predicated region
  $region38: #{psp_head_forward.1} parent=0 // pred_check
    _
  $region39: #{psp_head_forward.1} parent=0 // pred_check_branch
    %35 = sbr.rel (0) target = $region41
  $region40: #{psp_head_forward.1} parent=0 // pred_region
    _
  $region41: #{psp_head_forward.1} parent=0 // pred_fallthru
    _
  // Predicated region
  $region42: #{psp_head_forward.1} parent=0 // pred_check
    _
  $region43: #{psp_head_forward.1} parent=0 // pred_check_branch
    %37 = sbr.rel (0) target = $region45
  $region44: #{psp_head_forward.1} parent=0 // pred_region
    _
  $region45: #{psp_head_forward.1} parent=0 // pred_fallthru
    _
  %v38 = vld [vmem:[%s0] sm:$0xff]
  %v39 = vld [vmem:[%s0 + $0x8] sm:$0xff]
  %v40 = vld [vmem:[%s0 + $0x10] sm:$0xff]
  %v41 = vld [vmem:[%s0 + $0x18] sm:$0xff]
  %v42 = vld [vmem:[%s1] sm:$0xff]
  %v43 = vld [vmem:[%s1 + $0x8] sm:$0xff]
  %v44 = vld [vmem:[%s1 + $0x10] sm:$0xff]
  %v45 = vld [vmem:[%s1 + $0x18] sm:$0xff]
  %v46 = vld [vmem:[%s1 + $0x20] sm:$0xff]
  %v47 = vld [vmem:[%s1 + $0x28] sm:$0xff]
  %v48 = vld [vmem:[%s1 + $0x30] sm:$0xff]
  %v49 = vld [vmem:[%s1 + $0x38] sm:$0xff]
  %v50 = vld [vmem:[%s1 + $0x40] sm:$0xff]
  %v51 = vld [vmem:[%s1 + $0x48] sm:$0xff]
  %v52 = vld [vmem:[%s1 + $0x50] sm:$0xff]
  %v53 = vld [vmem:[%s1 + $0x58] sm:$0xff]
  %v54 = vld [vmem:[%s1 + $0x60] sm:$0xff]
  %v55 = vld [vmem:[%s1 + $0x68] sm:$0xff]
  %v56 = vld [vmem:[%s1 + $0x70] sm:$0xff]
  %v57 = vld [vmem:[%s1 + $0x78] sm:$0xff]
  %v58 = vld [vmem:[%s1 + $0x80] sm:$0xff]
  %v59 = vld [vmem:[%s1 + $0x88] sm:$0xff]
  %v60 = vld [vmem:[%s1 + $0x90] sm:$0xff]
  %v61 = vld [vmem:[%s1 + $0x98] sm:$0xff]
  %v62 = vld [vmem:[%s1 + $0xa0] sm:$0xff]
  %v63 = vld [vmem:[%s1 + $0xa8] sm:$0xff]
  %v64 = vld [vmem:[%s1 + $0xb0] sm:$0xff]
  %v65 = vld [vmem:[%s1 + $0xb8] sm:$0xff]
  %v66 = vld [vmem:[%s1 + $0xc0] sm:$0xff]
  %v67 = vld [vmem:[%s1 + $0xc8] sm:$0xff]
  %v68 = vld [vmem:[%s1 + $0xd0] sm:$0xff]
  %v69 = vld [vmem:[%s1 + $0xd8] sm:$0xff]
  %v70 = vld [vmem:[%s1 + $0xe0] sm:$0xff]
  %v71 = vld [vmem:[%s1 + $0xe8] sm:$0xff]
  %v72 = vld [vmem:[%s1 + $0xf0] sm:$0xff]
  %v73 = vld [vmem:[%s1 + $0xf8] sm:$0xff]
  %74 = vmatprep.subr.mxu0 0.0
  %75 = vmatpush1.msra.mxu0 %v57
  %76 = vmatprep.subr.mxu0 0.0
  %77 = vmatpush1.msra.mxu0 %v56
  %78 = vmatprep.subr.mxu0 0.0
  %79 = vmatpush1.msra.mxu0 %v55
  %80 = vmatprep.subr.mxu0 0.0
  %81 = vmatpush1.msra.mxu0 %v54
  %82 = vmatprep.subr.mxu0 0.0
  %83 = vmatpush1.msra.mxu0 %v53
  %84 = vmatprep.subr.mxu0 0.0
  %85 = vmatpush1.msra.mxu0 %v52
  %86 = vmatprep.subr.mxu0 0.0
  %87 = vmatpush1.msra.mxu0 %v51
  %88 = vmatprep.subr.mxu0 0.0
  %89 = vmatpush1.msra.mxu0 %v50
  %90 = vmatprep.subr.mxu0 0.0
  %91 = vmatpush1.msra.mxu0 %v49
  %92 = vmatprep.subr.mxu0 0.0
  %93 = vmatpush1.msra.mxu0 %v48
  %94 = vmatprep.subr.mxu0 0.0
  %95 = vmatpush1.msra.mxu0 %v47
  %96 = vmatprep.subr.mxu0 0.0
  %97 = vmatpush1.msra.mxu0 %v46
  %98 = vmatprep.subr.mxu0 0.0
  %99 = vmatpush1.msra.mxu0 %v45
  %100 = vmatprep.subr.mxu0 0.0
  %101 = vmatpush1.msra.mxu0 %v44
  %102 = vmatprep.subr.mxu0 0.0
  %103 = vmatpush1.msra.mxu0 %v43
  %104 = vmatprep.subr.mxu0 0.0
  %105 = vmatpush1.msra.mxu0 %v42
  %106 = vmatprep.subr.mxu0 0.0
  %107 = vmatpush2.msra.mxu0 %v73
  %108 = vmatprep.subr.mxu0 0.0
  %109 = vmatpush2.msra.mxu0 %v72
  %110 = vmatprep.subr.mxu0 0.0
  %111 = vmatpush2.msra.mxu0 %v71
  %112 = vmatprep.subr.mxu0 0.0
  %113 = vmatpush2.msra.mxu0 %v70
  %114 = vmatprep.subr.mxu0 0.0
  %115 = vmatpush2.msra.mxu0 %v69
  %116 = vmatprep.subr.mxu0 0.0
  %117 = vmatpush2.msra.mxu0 %v68
  %118 = vmatprep.subr.mxu0 0.0
  %119 = vmatpush2.msra.mxu0 %v67
  %120 = vmatprep.subr.mxu0 0.0
  %121 = vmatpush2.msra.mxu0 %v66
  %122 = vmatprep.subr.mxu0 0.0
  %123 = vmatpush2.msra.mxu0 %v65
  %124 = vmatprep.subr.mxu0 0.0
  %125 = vmatpush2.msra.mxu0 %v64
  %126 = vmatprep.subr.mxu0 0.0
  %127 = vmatpush2.msra.mxu0 %v63
  %128 = vmatprep.subr.mxu0 0.0
  %129 = vmatpush2.msra.mxu0 %v62
  %130 = vmatprep.subr.mxu0 0.0
  %131 = vmatpush2.msra.mxu0 %v61
  %132 = vmatprep.subr.mxu0 0.0
  %133 = vmatpush2.msra.mxu0 %v60
  %134 = vmatprep.subr.mxu0 0.0
  %135 = vmatpush2.msra.mxu0 %v59
  %136 = vmatprep.subr.mxu0 0.0
  %137 = vmatpush2.msra.mxu0 %v58
  %138 = vmatprep.mubr.f32.mxu0 %v39
  %139 = vmatmul.mubr.f32.gmra.mxu0 %v38
  %v140 = vpop.f32.mrf.mxu0
  %v141 = vadd.f32 0.0, %v140
  %v142 = vpop.f32.mrf.mxu0
  %143 = vmatprep.mubr.f32.mxu0 %v41
  %144 = vmatmul.mubr.f32.gmra.mxu0 %v40
  %v145 = vpop.f32.mrf.mxu0
  %v146 = vadd.f32 0.0, %v145
  %v147 = vpop.f32.mrf.mxu0
  %148 = vdwg.mxu0
  %v149 = vld [vmem:[%s3] sm:$0xff]
  %v150 = vld [vmem:[%s3 + $0x8] sm:$0xff]
  %v151 = vld [vmem:[%s4] sm:$0xff]
  %v152 = vld [vmem:[%s4 + $0x8] sm:$0xff]
  %154 = vset.pattern.permute.xlu0 0
  %155 = vperm.xlu0 %154, %v151
  %v156 = vpop.permute.xlu0 %155
  %159 = vset.pattern.permute.xlu0 0
  %160 = vperm.xlu0 %159, %v152
  %v161 = vpop.permute.xlu0 %160
  %vm163 = vcmask 64512
  %v165 = vsel %vm163, %v149, 0
  %v168 = vsel %vm163, %v150, 0
  %170 = vmatprep.subr.mxu0 0.0
  %171 = vmatpush1.msra.mxu0 0.0
  %172 = vmatprep.subr.mxu0 0.0
  %173 = vmatpush1.msra.mxu0 0.0
  %174 = vmatprep.subr.mxu0 0.0
  %175 = vmatpush1.msra.mxu0 0.0
  %176 = vmatprep.subr.mxu0 0.0
  %177 = vmatpush1.msra.mxu0 0.0
  %178 = vmatprep.subr.mxu0 0.0
  %179 = vmatpush1.msra.mxu0 0.0
  %180 = vmatprep.subr.mxu0 0.0
  %181 = vmatpush1.msra.mxu0 0.0
  %182 = vmatprep.subr.mxu0 0.0
  %183 = vmatpush1.msra.mxu0 0.0
  %184 = vmatprep.subr.mxu0 0.0
  %185 = vmatpush1.msra.mxu0 0.0
  %186 = vmatprep.subr.mxu0 0.0
  %187 = vmatpush1.msra.mxu0 0.0
  %188 = vmatprep.subr.mxu0 0.0
  %189 = vmatpush1.msra.mxu0 0.0
  %190 = vmatprep.subr.mxu0 0.0
  %191 = vmatpush1.msra.mxu0 0.0
  %192 = vmatprep.subr.mxu0 0.0
  %193 = vmatpush1.msra.mxu0 0.0
  %194 = vmatprep.subr.mxu0 0.0
  %195 = vmatpush1.msra.mxu0 0.0
  %196 = vmatprep.subr.mxu0 0.0
  %197 = vmatpush1.msra.mxu0 0.0
  %198 = vmatprep.subr.mxu0 0.0
  %199 = vmatpush1.msra.mxu0 0.0
  %200 = vmatprep.subr.mxu0 0.0
  %201 = vmatpush1.msra.mxu0 %v141
  %202 = vmatprep.subr.mxu0 0.0
  %203 = vmatpush2.msra.mxu0 0.0
  %204 = vmatprep.subr.mxu0 0.0
  %205 = vmatpush2.msra.mxu0 0.0
  %206 = vmatprep.subr.mxu0 0.0
  %207 = vmatpush2.msra.mxu0 0.0
  %208 = vmatprep.subr.mxu0 0.0
  %209 = vmatpush2.msra.mxu0 0.0
  %210 = vmatprep.subr.mxu0 0.0
  %211 = vmatpush2.msra.mxu0 0.0
  %212 = vmatprep.subr.mxu0 0.0
  %213 = vmatpush2.msra.mxu0 0.0
  %214 = vmatprep.subr.mxu0 0.0
  %215 = vmatpush2.msra.mxu0 0.0
  %216 = vmatprep.subr.mxu0 0.0
  %217 = vmatpush2.msra.mxu0 0.0
  %218 = vmatprep.subr.mxu0 0.0
  %219 = vmatpush2.msra.mxu0 0.0
  %220 = vmatprep.subr.mxu0 0.0
  %221 = vmatpush2.msra.mxu0 0.0
  %222 = vmatprep.subr.mxu0 0.0
  %223 = vmatpush2.msra.mxu0 0.0
  %224 = vmatprep.subr.mxu0 0.0
  %225 = vmatpush2.msra.mxu0 0.0
  %226 = vmatprep.subr.mxu0 0.0
  %227 = vmatpush2.msra.mxu0 0.0
  %228 = vmatprep.subr.mxu0 0.0
  %229 = vmatpush2.msra.mxu0 0.0
  %230 = vmatprep.subr.mxu0 0.0
  %231 = vmatpush2.msra.mxu0 0.0
  %232 = vmatprep.subr.mxu0 0.0
  %233 = vmatpush2.msra.mxu0 0.0
  %234 = vmatprep.mubr.f32.mxu0 0.0
  %235 = vmatmul.mubr.f32.gmra.mxu0 %v165
  %v236 = vpop.f32.mrf.mxu0
  %v237 = vadd.f32 %v156, %v236
  %v238 = vpop.f32.mrf.mxu0
  %239 = vmatprep.mubr.f32.mxu0 0.0
  %240 = vmatmul.mubr.f32.gmra.mxu0 %v168
  %v241 = vpop.f32.mrf.mxu0
  %v242 = vadd.f32 %v161, %v241
  %v243 = vpop.f32.mrf.mxu0
  %244 = vdwg.mxu0
  %vm245 = vcmp.gt.f32.partialorder %v237, 0.0
  %vm246 = vcmp.gt.f32.partialorder %v242, 0.0
  %v247 = vld [vmem:[%s5] sm:$0xff]
  %v248 = vld [vmem:[%s5 + $0x8] sm:$0xff]
  %250 = vset.pattern.permute.xlu0 0
  %251 = vperm.xlu0 %250, %v247
  %v252 = vpop.permute.xlu0 %251
  %255 = vset.pattern.permute.xlu0 0
  %256 = vperm.xlu0 %255, %v248
  %v257 = vpop.permute.xlu0 %256
  %v259 = vmul.f32 %v252, %v237
  %v260 = vmul.f32 %v257, %v242
  %v261 = vsel %vm245, %v237, %v259
  %v262 = vsel %vm246, %v242, %v260
  %v263 = vld [vmem:[%s6] sm:$0xff]
  %v264 = vld [vmem:[%s6 + $0x8] sm:$0xff]
  %v265 = vmul.f32 %v261, %v263
  %v266 = vmul.f32 %v262, %v264
  %267 = vmatprep.subr.mxu0 0.0
  %268 = vmatpush1.msra.mxu0 0.0
  %269 = vmatprep.subr.mxu0 0.0
  %270 = vmatpush1.msra.mxu0 0.0
  %271 = vmatprep.subr.mxu0 0.0
  %272 = vmatpush1.msra.mxu0 0.0
  %273 = vmatprep.subr.mxu0 0.0
  %274 = vmatpush1.msra.mxu0 0.0
  %275 = vmatprep.subr.mxu0 0.0
  %276 = vmatpush1.msra.mxu0 0.0
  %277 = vmatprep.subr.mxu0 0.0
  %278 = vmatpush1.msra.mxu0 0.0
  %279 = vmatprep.subr.mxu0 0.0
  %280 = vmatpush1.msra.mxu0 0.0
  %281 = vmatprep.subr.mxu0 0.0
  %282 = vmatpush1.msra.mxu0 0.0
  %283 = vmatprep.subr.mxu0 0.0
  %284 = vmatpush1.msra.mxu0 0.0
  %285 = vmatprep.subr.mxu0 0.0
  %286 = vmatpush1.msra.mxu0 0.0
  %287 = vmatprep.subr.mxu0 0.0
  %288 = vmatpush1.msra.mxu0 0.0
  %289 = vmatprep.subr.mxu0 0.0
  %290 = vmatpush1.msra.mxu0 0.0
  %291 = vmatprep.subr.mxu0 0.0
  %292 = vmatpush1.msra.mxu0 0.0
  %293 = vmatprep.subr.mxu0 0.0
  %294 = vmatpush1.msra.mxu0 0.0
  %295 = vmatprep.subr.mxu0 0.0
  %296 = vmatpush1.msra.mxu0 0.0
  %297 = vmatprep.subr.mxu0 0.0
  %298 = vmatpush1.msra.mxu0 %v146
  %299 = vmatprep.subr.mxu0 0.0
  %300 = vmatpush2.msra.mxu0 0.0
  %301 = vmatprep.subr.mxu0 0.0
  %302 = vmatpush2.msra.mxu0 0.0
  %303 = vmatprep.subr.mxu0 0.0
  %304 = vmatpush2.msra.mxu0 0.0
  %305 = vmatprep.subr.mxu0 0.0
  %306 = vmatpush2.msra.mxu0 0.0
  %307 = vmatprep.subr.mxu0 0.0
  %308 = vmatpush2.msra.mxu0 0.0
  %309 = vmatprep.subr.mxu0 0.0
  %310 = vmatpush2.msra.mxu0 0.0
  %311 = vmatprep.subr.mxu0 0.0
  %312 = vmatpush2.msra.mxu0 0.0
  %313 = vmatprep.subr.mxu0 0.0
  %314 = vmatpush2.msra.mxu0 0.0
  %315 = vmatprep.subr.mxu0 0.0
  %316 = vmatpush2.msra.mxu0 0.0
  %317 = vmatprep.subr.mxu0 0.0
  %318 = vmatpush2.msra.mxu0 0.0
  %319 = vmatprep.subr.mxu0 0.0
  %320 = vmatpush2.msra.mxu0 0.0
  %321 = vmatprep.subr.mxu0 0.0
  %322 = vmatpush2.msra.mxu0 0.0
  %323 = vmatprep.subr.mxu0 0.0
  %324 = vmatpush2.msra.mxu0 0.0
  %325 = vmatprep.subr.mxu0 0.0
  %326 = vmatpush2.msra.mxu0 0.0
  %327 = vmatprep.subr.mxu0 0.0
  %328 = vmatpush2.msra.mxu0 0.0
  %329 = vmatprep.subr.mxu0 0.0
  %330 = vmatpush2.msra.mxu0 0.0
  %331 = vmatprep.mubr.f32.mxu0 0.0
  %332 = vmatmul.mubr.f32.gmra.mxu0 %v165
  %v333 = vpop.f32.mrf.mxu0
  %v334 = vadd.f32 %v156, %v333
  %v335 = vpop.f32.mrf.mxu0
  %336 = vmatprep.mubr.f32.mxu0 0.0
  %337 = vmatmul.mubr.f32.gmra.mxu0 %v168
  %v338 = vpop.f32.mrf.mxu0
  %v339 = vadd.f32 %v161, %v338
  %v340 = vpop.f32.mrf.mxu0
  %341 = vdwg.mxu0
  %vm342 = vcmp.gt.f32.partialorder %v334, 0.0
  %vm343 = vcmp.gt.f32.partialorder %v339, 0.0
  %v344 = vmul.f32 %v252, %v334
  %v345 = vmul.f32 %v257, %v339
  %v346 = vsel %vm342, %v334, %v344
  %v347 = vsel %vm343, %v339, %v345
  %v348 = vmul.f32 %v346, %v263
  %v349 = vmul.f32 %v347, %v264
  %v350 = vld [vmem:[%s2] sm:$0xff]
  %v351 = vld [vmem:[%s2 + $0x8] sm:$0xff]
  %v352 = vld [vmem:[%s2 + $0x10] sm:$0xff]
  %v353 = vld [vmem:[%s2 + $0x18] sm:$0xff]
  %v354 = vld [vmem:[%s2 + $0x20] sm:$0xff]
  %v355 = vld [vmem:[%s2 + $0x28] sm:$0xff]
  %v356 = vld [vmem:[%s2 + $0x30] sm:$0xff]
  %v357 = vld [vmem:[%s2 + $0x38] sm:$0xff]
  %v358 = vld [vmem:[%s2 + $0x40] sm:$0xff]
  %v359 = vld [vmem:[%s2 + $0x48] sm:$0xff]
  %v360 = vld [vmem:[%s2 + $0x50] sm:$0xff]
  %v361 = vld [vmem:[%s2 + $0x58] sm:$0xff]
  %v362 = vld [vmem:[%s2 + $0x60] sm:$0x3]
  %v363 = vld [vmem:[%s2 + $0x68] sm:$0x3]
  %vm364 = vcmask 408576
  %v366 = vsel %vm364, %v265, 0
  %v369 = vsel %vm364, %v266, 0
  %v372 = vsel %vm364, %v348, 0
  %v375 = vsel %vm364, %v349, 0
  %vm377 = vcmask 1041408
  %v379 = vsel %vm377, %v362, 0
  %v382 = vsel %vm377, %v363, 0
  %384 = vmatprep.subr.mxu0 0.0
  %385 = vmatpush1.msra.mxu0 0.0
  %386 = vmatprep.subr.mxu0 0.0
  %387 = vmatpush1.msra.mxu0 0.0
  %388 = vmatprep.subr.mxu0 0.0
  %389 = vmatpush1.msra.mxu0 0.0
  %390 = vmatprep.subr.mxu0 0.0
  %391 = vmatpush1.msra.mxu0 0.0
  %392 = vmatprep.subr.mxu0 0.0
  %393 = vmatpush1.msra.mxu0 0.0
  %394 = vmatprep.subr.mxu0 0.0
  %395 = vmatpush1.msra.mxu0 0.0
  %396 = vmatprep.subr.mxu0 0.0
  %397 = vmatpush1.msra.mxu0 0.0
  %398 = vmatprep.subr.mxu0 0.0
  %399 = vmatpush1.msra.mxu0 0.0
  %400 = vmatprep.subr.mxu0 0.0
  %401 = vmatpush1.msra.mxu0 0.0
  %402 = vmatprep.subr.mxu0 %v382
  %403 = vmatpush1.msra.mxu0 %v379
  %404 = vmatprep.subr.mxu0 %v361
  %405 = vmatpush1.msra.mxu0 %v360
  %406 = vmatprep.subr.mxu0 %v359
  %407 = vmatpush1.msra.mxu0 %v358
  %408 = vmatprep.subr.mxu0 %v357
  %409 = vmatpush1.msra.mxu0 %v356
  %410 = vmatprep.subr.mxu0 %v355
  %411 = vmatpush1.msra.mxu0 %v354
  %412 = vmatprep.subr.mxu0 %v353
  %413 = vmatpush1.msra.mxu0 %v352
  %414 = vmatprep.subr.mxu0 %v351
  %415 = vmatpush1.msra.mxu0 %v350
  %416 = vmatprep.subr.mxu0 0.0
  %417 = vmatpush2.msra.mxu0 0.0
  %418 = vmatprep.subr.mxu0 0.0
  %419 = vmatpush2.msra.mxu0 0.0
  %420 = vmatprep.subr.mxu0 0.0
  %421 = vmatpush2.msra.mxu0 0.0
  %422 = vmatprep.subr.mxu0 0.0
  %423 = vmatpush2.msra.mxu0 0.0
  %424 = vmatprep.subr.mxu0 0.0
  %425 = vmatpush2.msra.mxu0 0.0
  %426 = vmatprep.subr.mxu0 0.0
  %427 = vmatpush2.msra.mxu0 0.0
  %428 = vmatprep.subr.mxu0 0.0
  %429 = vmatpush2.msra.mxu0 0.0
  %430 = vmatprep.subr.mxu0 0.0
  %431 = vmatpush2.msra.mxu0 0.0
  %432 = vmatprep.subr.mxu0 0.0
  %433 = vmatpush2.msra.mxu0 0.0
  %434 = vmatprep.subr.mxu0 0.0
  %435 = vmatpush2.msra.mxu0 0.0
  %436 = vmatprep.subr.mxu0 0.0
  %437 = vmatpush2.msra.mxu0 0.0
  %438 = vmatprep.subr.mxu0 0.0
  %439 = vmatpush2.msra.mxu0 0.0
  %440 = vmatprep.subr.mxu0 0.0
  %441 = vmatpush2.msra.mxu0 0.0
  %442 = vmatprep.subr.mxu0 0.0
  %443 = vmatpush2.msra.mxu0 0.0
  %444 = vmatprep.subr.mxu0 0.0
  %445 = vmatpush2.msra.mxu0 0.0
  %446 = vmatprep.subr.mxu0 0.0
  %447 = vmatpush2.msra.mxu0 0.0
  %448 = vmatprep.mubr.f32.mxu0 0.0
  %449 = vmatmul.mubr.f32.gmra.mxu0 %v366
  %v450 = vpop.f32.mrf.mxu0
  %v451 = vadd.f32 0.0, %v450
  %v452 = vpop.f32.mrf.mxu0
  %v453 = vadd.f32 0.0, %v452
  %454 = vmatprep.mubr.f32.mxu0 0.0
  %455 = vmatmul.mubr.f32.gmra.mxu0 %v369
  %v456 = vpop.f32.mrf.mxu0
  %v457 = vadd.f32 0.0, %v456
  %v458 = vpop.f32.mrf.mxu0
  %v459 = vadd.f32 0.0, %v458
  %460 = vmatprep.mubr.f32.mxu0 0.0
  %461 = vmatmul.mubr.f32.gmra.mxu0 %v372
  %v462 = vpop.f32.mrf.mxu0
  %v463 = vadd.f32 0.0, %v462
  %v464 = vpop.f32.mrf.mxu0
  %v465 = vadd.f32 0.0, %v464
  %466 = vmatprep.mubr.f32.mxu0 0.0
  %467 = vmatmul.mubr.f32.gmra.mxu0 %v375
  %v468 = vpop.f32.mrf.mxu0
  %v469 = vadd.f32 0.0, %v468
  %v470 = vpop.f32.mrf.mxu0
  %v471 = vadd.f32 0.0, %v470
  %472 = vdwg.mxu0
  %v473 = vld [vmem:[%s7] sm:$0xff]
  %v474 = vld [vmem:[%s7 + $0x8] sm:$0xff]
  %v475 = vld [vmem:[%s7 + $0x10] sm:$0xff]
  %v476 = vld [vmem:[%s7 + $0x18] sm:$0xff]
  %v477 = vld [vmem:[%s7 + $0x20] sm:$0xff]
  %v478 = vld [vmem:[%s7 + $0x28] sm:$0xff]
  %v479 = vld [vmem:[%s7 + $0x30] sm:$0xff]
  %v480 = vld [vmem:[%s7 + $0x38] sm:$0xff]
  %v481 = vld [vmem:[%s7 + $0x40] sm:$0xff]
  %vm482 = vcmask 195584
  %v484 = vsel %vm482, %v473, 0
  %v487 = vsel %vm482, %v474, 0
  %v490 = vsel %vm482, %v475, 0
  %v493 = vsel %vm482, %v476, 0
  %v496 = vsel %vm482, %v477, 0
  %v499 = vsel %vm482, %v478, 0
  %v502 = vsel %vm482, %v479, 0
  %v505 = vsel %vm482, %v480, 0
  %v508 = vsel %vm482, %v481, 0
  %510 = vmatprep.subr.mxu0 0.0
  %511 = vmatpush1.msra.mxu0 0.0
  %512 = vmatprep.subr.mxu0 0.0
  %513 = vmatpush1.msra.mxu0 0.0
  %514 = vmatprep.subr.mxu0 0.0
  %515 = vmatpush1.msra.mxu0 0.0
  %516 = vmatprep.subr.mxu0 0.0
  %517 = vmatpush1.msra.mxu0 0.0
  %518 = vmatprep.subr.mxu0 0.0
  %519 = vmatpush1.msra.mxu0 0.0
  %520 = vmatprep.subr.mxu0 0.0
  %521 = vmatpush1.msra.mxu0 0.0
  %522 = vmatprep.subr.mxu0 0.0
  %523 = vmatpush1.msra.mxu0 0.0
  %524 = vmatprep.subr.mxu0 0.0
  %525 = vmatpush1.msra.mxu0 0.0
  %526 = vmatprep.subr.mxu0 0.0
  %527 = vmatpush1.msra.mxu0 0.0
  %528 = vmatprep.subr.mxu0 0.0
  %529 = vmatpush1.msra.mxu0 0.0
  %530 = vmatprep.subr.mxu0 0.0
  %531 = vmatpush1.msra.mxu0 0.0
  %532 = vmatprep.subr.mxu0 0.0
  %533 = vmatpush1.msra.mxu0 0.0
  %534 = vmatprep.subr.mxu0 0.0
  %535 = vmatpush1.msra.mxu0 0.0
  %536 = vmatprep.subr.mxu0 %v459
  %537 = vmatpush1.msra.mxu0 %v457
  %538 = vmatprep.subr.mxu0 %v453
  %539 = vmatpush1.msra.mxu0 %v451
  %540 = vmatprep.subr.mxu0 %v39
  %541 = vmatpush1.msra.mxu0 %v38
  %542 = vmatprep.subr.mxu0 0.0
  %543 = vmatpush2.msra.mxu0 0.0
  %544 = vmatprep.subr.mxu0 0.0
  %545 = vmatpush2.msra.mxu0 0.0
  %546 = vmatprep.subr.mxu0 0.0
  %547 = vmatpush2.msra.mxu0 0.0
  %548 = vmatprep.subr.mxu0 0.0
  %549 = vmatpush2.msra.mxu0 0.0
  %550 = vmatprep.subr.mxu0 0.0
  %551 = vmatpush2.msra.mxu0 0.0
  %552 = vmatprep.subr.mxu0 0.0
  %553 = vmatpush2.msra.mxu0 0.0
  %554 = vmatprep.subr.mxu0 0.0
  %555 = vmatpush2.msra.mxu0 0.0
  %556 = vmatprep.subr.mxu0 0.0
  %557 = vmatpush2.msra.mxu0 0.0
  %558 = vmatprep.subr.mxu0 0.0
  %559 = vmatpush2.msra.mxu0 0.0
  %560 = vmatprep.subr.mxu0 0.0
  %561 = vmatpush2.msra.mxu0 0.0
  %562 = vmatprep.subr.mxu0 0.0
  %563 = vmatpush2.msra.mxu0 0.0
  %564 = vmatprep.subr.mxu0 0.0
  %565 = vmatpush2.msra.mxu0 0.0
  %566 = vmatprep.subr.mxu0 0.0
  %567 = vmatpush2.msra.mxu0 0.0
  %568 = vmatprep.subr.mxu0 0.0
  %569 = vmatpush2.msra.mxu0 0.0
  %570 = vmatprep.subr.mxu0 0.0
  %571 = vmatpush2.msra.mxu0 0.0
  %572 = vmatprep.subr.mxu0 0.0
  %573 = vmatpush2.msra.mxu0 0.0
  %574 = vmatprep.mubr.f32.mxu0 0.0
  %575 = vmatmul.mubr.f32.gmra.mxu0 %v484
  %v576 = vpop.f32.mrf.mxu0
  %v577 = vadd.f32 0.0, %v576
  %v578 = vpop.f32.mrf.mxu0
  %v579 = vadd.f32 0.0, %v578
  %580 = vmatprep.mubr.f32.mxu0 0.0
  %581 = vmatmul.mubr.f32.gmra.mxu0 %v487
  %v582 = vpop.f32.mrf.mxu0
  %v583 = vadd.f32 0.0, %v582
  %v584 = vpop.f32.mrf.mxu0
  %v585 = vadd.f32 0.0, %v584
  %586 = vmatprep.mubr.f32.mxu0 0.0
  %587 = vmatmul.mubr.f32.gmra.mxu0 %v490
  %v588 = vpop.f32.mrf.mxu0
  %v589 = vadd.f32 0.0, %v588
  %v590 = vpop.f32.mrf.mxu0
  %v591 = vadd.f32 0.0, %v590
  %592 = vmatprep.mubr.f32.mxu0 0.0
  %593 = vmatmul.mubr.f32.gmra.mxu0 %v493
  %v594 = vpop.f32.mrf.mxu0
  %v595 = vadd.f32 0.0, %v594
  %v596 = vpop.f32.mrf.mxu0
  %v597 = vadd.f32 0.0, %v596
  %598 = vmatprep.mubr.f32.mxu0 0.0
  %599 = vmatmul.mubr.f32.gmra.mxu0 %v496
  %v600 = vpop.f32.mrf.mxu0
  %v601 = vadd.f32 0.0, %v600
  %v602 = vpop.f32.mrf.mxu0
  %v603 = vadd.f32 0.0, %v602
  %604 = vmatprep.mubr.f32.mxu0 0.0
  %605 = vmatmul.mubr.f32.gmra.mxu0 %v499
  %v606 = vpop.f32.mrf.mxu0
  %v607 = vadd.f32 0.0, %v606
  %v608 = vpop.f32.mrf.mxu0
  %v609 = vadd.f32 0.0, %v608
  %610 = vmatprep.mubr.f32.mxu0 0.0
  %611 = vmatmul.mubr.f32.gmra.mxu0 %v502
  %v612 = vpop.f32.mrf.mxu0
  %v613 = vadd.f32 0.0, %v612
  %v614 = vpop.f32.mrf.mxu0
  %v615 = vadd.f32 0.0, %v614
  %616 = vmatprep.mubr.f32.mxu0 0.0
  %617 = vmatmul.mubr.f32.gmra.mxu0 %v505
  %v618 = vpop.f32.mrf.mxu0
  %v619 = vadd.f32 0.0, %v618
  %v620 = vpop.f32.mrf.mxu0
  %v621 = vadd.f32 0.0, %v620
  %622 = vmatprep.mubr.f32.mxu0 0.0
  %623 = vmatmul.mubr.f32.gmra.mxu0 %v508
  %v624 = vpop.f32.mrf.mxu0
  %v625 = vadd.f32 0.0, %v624
  %v626 = vpop.f32.mrf.mxu0
  %v627 = vadd.f32 0.0, %v626
  %628 = vdwg.mxu0
  %629 = vrot.lane.b32.xlu0 %v577, 13
  %v630 = vpop.permute.xlu0 %629
  %631 = vrot.lane.b32.xlu0 %v579, 13
  %v632 = vpop.permute.xlu0 %631
  %v633 = vlaneseq
  %v634 = vand.u32 %v633, 127
  %vm635 = vcmp.lt.s32.totalorder %v634, 13
  %v636 = vsel %vm635, %v630, %v632
  %v637 = vsel %vm635, %v632, %v630
  %v638 = vld [vmem:[%s8] sm:$0x3]
  %v640 = vlaneseq
  %v641 = vshrl.u32 %v640, 7
  %v642 = vsub.s32 0, %v641
  %v643 = vrot.slane %v638, %v642
  %v644 = vlaneseq
  %v645 = vshrl.u32 %v644, 7
  %v646 = vsub.s32 1, %v645
  %v647 = vrot.slane %v638, %v646
  %v650 = vmul.f32 %v637, %v643
  %v651 = vmul.f32 %v636, %v647
  %652 = vrot.lane.b32.xlu0 %v583, 12
  %v653 = vpop.permute.xlu0 %652
  %654 = vrot.lane.b32.xlu0 %v585, 12
  %v655 = vpop.permute.xlu0 %654
  %vm656 = vcmp.lt.s32.totalorder %v634, 12
  %v657 = vsel %vm656, %v653, %v655
  %v658 = vsel %vm656, %v655, %v653
  %s659 = scalar_lea.vmem %s8, 2
  %v660 = vld [vmem:[%s659] sm:$0x3]
  %v662 = vlaneseq
  %v663 = vshrl.u32 %v662, 7
  %v664 = vsub.s32 0, %v663
  %v665 = vrot.slane %v660, %v664
  %v666 = vlaneseq
  %v667 = vshrl.u32 %v666, 7
  %v668 = vsub.s32 1, %v667
  %v669 = vrot.slane %v660, %v668
  %v672 = vmul.f32 %v658, %v665
  %v673 = vmul.f32 %v657, %v669
  %674 = vrot.lane.b32.xlu0 %v589, 11
  %v675 = vpop.permute.xlu0 %674
  %676 = vrot.lane.b32.xlu0 %v591, 11
  %v677 = vpop.permute.xlu0 %676
  %vm678 = vcmp.lt.s32.totalorder %v634, 11
  %v679 = vsel %vm678, %v675, %v677
  %v680 = vsel %vm678, %v677, %v675
  %s681 = scalar_lea.vmem %s8, 4
  %v682 = vld [vmem:[%s681] sm:$0x3]
  %v684 = vlaneseq
  %v685 = vshrl.u32 %v684, 7
  %v686 = vsub.s32 0, %v685
  %v687 = vrot.slane %v682, %v686
  %v688 = vlaneseq
  %v689 = vshrl.u32 %v688, 7
  %v690 = vsub.s32 1, %v689
  %v691 = vrot.slane %v682, %v690
  %v694 = vmul.f32 %v680, %v687
  %v695 = vmul.f32 %v679, %v691
  %696 = vrot.lane.b32.xlu0 %v595, 1
  %v697 = vpop.permute.xlu0 %696
  %698 = vrot.lane.b32.xlu0 %v597, 1
  %v699 = vpop.permute.xlu0 %698
  %vm700 = vcmp.lt.s32.totalorder %v634, 1
  %v701 = vsel %vm700, %v697, %v699
  %v702 = vsel %vm700, %v699, %v697
  %s703 = scalar_lea.vmem %s8, 6
  %v704 = vld [vmem:[%s703] sm:$0x3]
  %v706 = vlaneseq
  %v707 = vshrl.u32 %v706, 7
  %v708 = vsub.s32 0, %v707
  %v709 = vrot.slane %v704, %v708
  %v710 = vlaneseq
  %v711 = vshrl.u32 %v710, 7
  %v712 = vsub.s32 1, %v711
  %v713 = vrot.slane %v704, %v712
  %v716 = vmul.f32 %v702, %v709
  %v717 = vmul.f32 %v701, %v713
  %v718 = vadd.f32 %v650, %v716
  %v719 = vadd.f32 %v651, %v717
  %v720 = vadd.f32 %v672, %v601
  %v721 = vadd.f32 %v673, %v603
  %722 = vrot.lane.b32.xlu0 %v607, 127
  %v723 = vpop.permute.xlu0 %722
  %724 = vrot.lane.b32.xlu0 %v609, 127
  %v725 = vpop.permute.xlu0 %724
  %vm726 = vcmp.lt.s32.totalorder %v634, 127
  %v727 = vsel %vm726, %v723, %v725
  %v728 = vsel %vm726, %v725, %v723
  %s729 = scalar_lea.vmem %s8, 10
  %v730 = vld [vmem:[%s729] sm:$0x3]
  %v732 = vlaneseq
  %v733 = vshrl.u32 %v732, 7
  %v734 = vsub.s32 0, %v733
  %v735 = vrot.slane %v730, %v734
  %v736 = vlaneseq
  %v737 = vshrl.u32 %v736, 7
  %v738 = vsub.s32 1, %v737
  %v739 = vrot.slane %v730, %v738
  %v742 = vmul.f32 %v727, %v735
  %v743 = vmul.f32 %v728, %v739
  %v744 = vadd.f32 %v694, %v742
  %v745 = vadd.f32 %v695, %v743
  %746 = vrot.lane.b32.xlu0 %v613, 117
  %v747 = vpop.permute.xlu0 %746
  %748 = vrot.lane.b32.xlu0 %v615, 117
  %v749 = vpop.permute.xlu0 %748
  %vm750 = vcmp.lt.s32.totalorder %v634, 117
  %v751 = vsel %vm750, %v747, %v749
  %v752 = vsel %vm750, %v749, %v747
  %s753 = scalar_lea.vmem %s8, 12
  %v754 = vld [vmem:[%s753] sm:$0x3]
  %v756 = vlaneseq
  %v757 = vshrl.u32 %v756, 7
  %v758 = vsub.s32 0, %v757
  %v759 = vrot.slane %v754, %v758
  %v760 = vlaneseq
  %v761 = vshrl.u32 %v760, 7
  %v762 = vsub.s32 1, %v761
  %v763 = vrot.slane %v754, %v762
  %v766 = vmul.f32 %v751, %v759
  %v767 = vmul.f32 %v752, %v763
  %v768 = vadd.f32 %v718, %v766
  %v769 = vadd.f32 %v719, %v767
  %770 = vrot.lane.b32.xlu0 %v619, 116
  %v771 = vpop.permute.xlu0 %770
  %772 = vrot.lane.b32.xlu0 %v621, 116
  %v773 = vpop.permute.xlu0 %772
  %vm774 = vcmp.lt.s32.totalorder %v634, 116
  %v775 = vsel %vm774, %v771, %v773
  %v776 = vsel %vm774, %v773, %v771
  %s777 = scalar_lea.vmem %s8, 14
  %v778 = vld [vmem:[%s777] sm:$0x3]
  %v780 = vlaneseq
  %v781 = vshrl.u32 %v780, 7
  %v782 = vsub.s32 0, %v781
  %v783 = vrot.slane %v778, %v782
  %v784 = vlaneseq
  %v785 = vshrl.u32 %v784, 7
  %v786 = vsub.s32 1, %v785
  %v787 = vrot.slane %v778, %v786
  %v790 = vmul.f32 %v775, %v783
  %v791 = vmul.f32 %v776, %v787
  %v792 = vadd.f32 %v720, %v790
  %v793 = vadd.f32 %v721, %v791
  %794 = vrot.lane.b32.xlu0 %v625, 115
  %v795 = vpop.permute.xlu0 %794
  %796 = vrot.lane.b32.xlu0 %v627, 115
  %v797 = vpop.permute.xlu0 %796
  %vm798 = vcmp.lt.s32.totalorder %v634, 115
  %v799 = vsel %vm798, %v795, %v797
  %v800 = vsel %vm798, %v797, %v795
  %s801 = scalar_lea.vmem %s8, 16
  %v802 = vld [vmem:[%s801] sm:$0x3]
  %v804 = vlaneseq
  %v805 = vshrl.u32 %v804, 7
  %v806 = vsub.s32 0, %v805
  %v807 = vrot.slane %v802, %v806
  %v808 = vlaneseq
  %v809 = vshrl.u32 %v808, 7
  %v810 = vsub.s32 1, %v809
  %v811 = vrot.slane %v802, %v810
  %v814 = vmul.f32 %v799, %v807
  %v815 = vmul.f32 %v800, %v811
  %v816 = vadd.f32 %v744, %v814
  %v817 = vadd.f32 %v745, %v815
  %v818 = vadd.f32 %v768, %v792
  %v819 = vadd.f32 %v769, %v793
  %v820 = vld [vmem:[%s9] sm:$0xff]
  %822 = vset.pattern.permute.xlu0 0
  %823 = vperm.xlu0 %822, %v820
  %v824 = vpop.permute.xlu0 %823
  %v826 = vadd.f32 %v816, %v824
  %v827 = vadd.f32 %v817, %v824
  %v828 = vadd.f32 %v818, %v826
  %v829 = vadd.f32 %v819, %v827
  %vm830 = vcmp.gt.f32.partialorder %v828, 0.0
  %vm831 = vcmp.gt.f32.partialorder %v829, 0.0
  %v832 = vld [vmem:[%s10] sm:$0xff]
  %834 = vset.pattern.permute.xlu0 0
  %835 = vperm.xlu0 %834, %v832
  %v836 = vpop.permute.xlu0 %835
  %v838 = vmul.f32 %v836, %v828
  %v839 = vmul.f32 %v836, %v829
  %v840 = vsel %vm830, %v828, %v838
  %v841 = vsel %vm831, %v829, %v839
  %842 = vst [vmem:[%s11] sm:$0xff] %v840
  %vm843 = vcmask 130048
  %844 = vst.msk [vmem:[%s11 + $0x8] sm:$0xff] %vm843, %v841
  %v845 = vld [vmem:[%s7] sm:$0xff]
  %v846 = vld [vmem:[%s7 + $0x8] sm:$0xff]
  %v847 = vld [vmem:[%s7 + $0x10] sm:$0xff]
  %v848 = vld [vmem:[%s7 + $0x18] sm:$0xff]
  %v849 = vld [vmem:[%s7 + $0x20] sm:$0xff]
  %v850 = vld [vmem:[%s7 + $0x28] sm:$0xff]
  %v851 = vld [vmem:[%s7 + $0x30] sm:$0xff]
  %v852 = vld [vmem:[%s7 + $0x38] sm:$0xff]
  %v853 = vld [vmem:[%s7 + $0x40] sm:$0xff]
  %v855 = vsel %vm482, %v845, 0
  %v858 = vsel %vm482, %v846, 0
  %v861 = vsel %vm482, %v847, 0
  %v864 = vsel %vm482, %v848, 0
  %v867 = vsel %vm482, %v849, 0
  %v870 = vsel %vm482, %v850, 0
  %v873 = vsel %vm482, %v851, 0
  %v876 = vsel %vm482, %v852, 0
  %v879 = vsel %vm482, %v853, 0
  %881 = vmatprep.subr.mxu0 0.0
  %882 = vmatpush1.msra.mxu0 0.0
  %883 = vmatprep.subr.mxu0 0.0
  %884 = vmatpush1.msra.mxu0 0.0
  %885 = vmatprep.subr.mxu0 0.0
  %886 = vmatpush1.msra.mxu0 0.0
  %887 = vmatprep.subr.mxu0 0.0
  %888 = vmatpush1.msra.mxu0 0.0
  %889 = vmatprep.subr.mxu0 0.0
  %890 = vmatpush1.msra.mxu0 0.0
  %891 = vmatprep.subr.mxu0 0.0
  %892 = vmatpush1.msra.mxu0 0.0
  %893 = vmatprep.subr.mxu0 0.0
  %894 = vmatpush1.msra.mxu0 0.0
  %895 = vmatprep.subr.mxu0 0.0
  %896 = vmatpush1.msra.mxu0 0.0
  %897 = vmatprep.subr.mxu0 0.0
  %898 = vmatpush1.msra.mxu0 0.0
  %899 = vmatprep.subr.mxu0 0.0
  %900 = vmatpush1.msra.mxu0 0.0
  %901 = vmatprep.subr.mxu0 0.0
  %902 = vmatpush1.msra.mxu0 0.0
  %903 = vmatprep.subr.mxu0 0.0
  %904 = vmatpush1.msra.mxu0 0.0
  %905 = vmatprep.subr.mxu0 0.0
  %906 = vmatpush1.msra.mxu0 0.0
  %907 = vmatprep.subr.mxu0 %v471
  %908 = vmatpush1.msra.mxu0 %v469
  %909 = vmatprep.subr.mxu0 %v465
  %910 = vmatpush1.msra.mxu0 %v463
  %911 = vmatprep.subr.mxu0 %v41
  %912 = vmatpush1.msra.mxu0 %v40
  %913 = vmatprep.subr.mxu0 0.0
  %914 = vmatpush2.msra.mxu0 0.0
  %915 = vmatprep.subr.mxu0 0.0
  %916 = vmatpush2.msra.mxu0 0.0
  %917 = vmatprep.subr.mxu0 0.0
  %918 = vmatpush2.msra.mxu0 0.0
  %919 = vmatprep.subr.mxu0 0.0
  %920 = vmatpush2.msra.mxu0 0.0
  %921 = vmatprep.subr.mxu0 0.0
  %922 = vmatpush2.msra.mxu0 0.0
  %923 = vmatprep.subr.mxu0 0.0
  %924 = vmatpush2.msra.mxu0 0.0
  %925 = vmatprep.subr.mxu0 0.0
  %926 = vmatpush2.msra.mxu0 0.0
  %927 = vmatprep.subr.mxu0 0.0
  %928 = vmatpush2.msra.mxu0 0.0
  %929 = vmatprep.subr.mxu0 0.0
  %930 = vmatpush2.msra.mxu0 0.0
  %931 = vmatprep.subr.mxu0 0.0
  %932 = vmatpush2.msra.mxu0 0.0
  %933 = vmatprep.subr.mxu0 0.0
  %934 = vmatpush2.msra.mxu0 0.0
  %935 = vmatprep.subr.mxu0 0.0
  %936 = vmatpush2.msra.mxu0 0.0
  %937 = vmatprep.subr.mxu0 0.0
  %938 = vmatpush2.msra.mxu0 0.0
  %939 = vmatprep.subr.mxu0 0.0
  %940 = vmatpush2.msra.mxu0 0.0
  %941 = vmatprep.subr.mxu0 0.0
  %942 = vmatpush2.msra.mxu0 0.0
  %943 = vmatprep.subr.mxu0 0.0
  %944 = vmatpush2.msra.mxu0 0.0
  %945 = vmatprep.mubr.f32.mxu0 0.0
  %946 = vmatmul.mubr.f32.gmra.mxu0 %v855
  %v947 = vpop.f32.mrf.mxu0
  %v948 = vadd.f32 0.0, %v947
  %v949 = vpop.f32.mrf.mxu0
  %v950 = vadd.f32 0.0, %v949
  %951 = vmatprep.mubr.f32.mxu0 0.0
  %952 = vmatmul.mubr.f32.gmra.mxu0 %v858
  %v953 = vpop.f32.mrf.mxu0
  %v954 = vadd.f32 0.0, %v953
  %v955 = vpop.f32.mrf.mxu0
  %v956 = vadd.f32 0.0, %v955
  %957 = vmatprep.mubr.f32.mxu0 0.0
  %958 = vmatmul.mubr.f32.gmra.mxu0 %v861
  %v959 = vpop.f32.mrf.mxu0
  %v960 = vadd.f32 0.0, %v959
  %v961 = vpop.f32.mrf.mxu0
  %v962 = vadd.f32 0.0, %v961
  %963 = vmatprep.mubr.f32.mxu0 0.0
  %964 = vmatmul.mubr.f32.gmra.mxu0 %v864
  %v965 = vpop.f32.mrf.mxu0
  %v966 = vadd.f32 0.0, %v965
  %v967 = vpop.f32.mrf.mxu0
  %v968 = vadd.f32 0.0, %v967
  %969 = vmatprep.mubr.f32.mxu0 0.0
  %970 = vmatmul.mubr.f32.gmra.mxu0 %v867
  %v971 = vpop.f32.mrf.mxu0
  %v972 = vadd.f32 0.0, %v971
  %v973 = vpop.f32.mrf.mxu0
  %v974 = vadd.f32 0.0, %v973
  %975 = vmatprep.mubr.f32.mxu0 0.0
  %976 = vmatmul.mubr.f32.gmra.mxu0 %v870
  %v977 = vpop.f32.mrf.mxu0
  %v978 = vadd.f32 0.0, %v977
  %v979 = vpop.f32.mrf.mxu0
  %v980 = vadd.f32 0.0, %v979
  %981 = vmatprep.mubr.f32.mxu0 0.0
  %982 = vmatmul.mubr.f32.gmra.mxu0 %v873
  %v983 = vpop.f32.mrf.mxu0
  %v984 = vadd.f32 0.0, %v983
  %v985 = vpop.f32.mrf.mxu0
  %v986 = vadd.f32 0.0, %v985
  %987 = vmatprep.mubr.f32.mxu0 0.0
  %988 = vmatmul.mubr.f32.gmra.mxu0 %v876
  %v989 = vpop.f32.mrf.mxu0
  %v990 = vadd.f32 0.0, %v989
  %v991 = vpop.f32.mrf.mxu0
  %v992 = vadd.f32 0.0, %v991
  %993 = vmatprep.mubr.f32.mxu0 0.0
  %994 = vmatmul.mubr.f32.gmra.mxu0 %v879
  %v995 = vpop.f32.mrf.mxu0
  %v996 = vadd.f32 0.0, %v995
  %v997 = vpop.f32.mrf.mxu0
  %v998 = vadd.f32 0.0, %v997
  %999 = vdwg.mxu0
  %1000 = vrot.lane.b32.xlu0 %v948, 13
  %v1001 = vpop.permute.xlu0 %1000
  %1002 = vrot.lane.b32.xlu0 %v950, 13
  %v1003 = vpop.permute.xlu0 %1002
  %v1004 = vsel %vm635, %v1001, %v1003
  %v1005 = vsel %vm635, %v1003, %v1001
  %v1006 = vld [vmem:[%s8] sm:$0x3]
  %v1008 = vlaneseq
  %v1009 = vshrl.u32 %v1008, 7
  %v1010 = vsub.s32 0, %v1009
  %v1011 = vrot.slane %v1006, %v1010
  %v1012 = vlaneseq
  %v1013 = vshrl.u32 %v1012, 7
  %v1014 = vsub.s32 1, %v1013
  %v1015 = vrot.slane %v1006, %v1014
  %v1018 = vmul.f32 %v1005, %v1011
  %v1019 = vmul.f32 %v1004, %v1015
  %1020 = vrot.lane.b32.xlu0 %v954, 12
  %v1021 = vpop.permute.xlu0 %1020
  %1022 = vrot.lane.b32.xlu0 %v956, 12
  %v1023 = vpop.permute.xlu0 %1022
  %v1024 = vsel %vm656, %v1021, %v1023
  %v1025 = vsel %vm656, %v1023, %v1021
  %v1026 = vld [vmem:[%s659] sm:$0x3]
  %v1028 = vlaneseq
  %v1029 = vshrl.u32 %v1028, 7
  %v1030 = vsub.s32 0, %v1029
  %v1031 = vrot.slane %v1026, %v1030
  %v1032 = vlaneseq
  %v1033 = vshrl.u32 %v1032, 7
  %v1034 = vsub.s32 1, %v1033
  %v1035 = vrot.slane %v1026, %v1034
  %v1038 = vmul.f32 %v1025, %v1031
  %v1039 = vmul.f32 %v1024, %v1035
  %1040 = vrot.lane.b32.xlu0 %v960, 11
  %v1041 = vpop.permute.xlu0 %1040
  %1042 = vrot.lane.b32.xlu0 %v962, 11
  %v1043 = vpop.permute.xlu0 %1042
  %v1044 = vsel %vm678, %v1041, %v1043
  %v1045 = vsel %vm678, %v1043, %v1041
  %v1046 = vld [vmem:[%s681] sm:$0x3]
  %v1048 = vlaneseq
  %v1049 = vshrl.u32 %v1048, 7
  %v1050 = vsub.s32 0, %v1049
  %v1051 = vrot.slane %v1046, %v1050
  %v1052 = vlaneseq
  %v1053 = vshrl.u32 %v1052, 7
  %v1054 = vsub.s32 1, %v1053
  %v1055 = vrot.slane %v1046, %v1054
  %v1058 = vmul.f32 %v1045, %v1051
  %v1059 = vmul.f32 %v1044, %v1055
  %1060 = vrot.lane.b32.xlu0 %v966, 1
  %v1061 = vpop.permute.xlu0 %1060
  %1062 = vrot.lane.b32.xlu0 %v968, 1
  %v1063 = vpop.permute.xlu0 %1062
  %v1064 = vsel %vm700, %v1061, %v1063
  %v1065 = vsel %vm700, %v1063, %v1061
  %v1066 = vld [vmem:[%s703] sm:$0x3]
  %v1068 = vlaneseq
  %v1069 = vshrl.u32 %v1068, 7
  %v1070 = vsub.s32 0, %v1069
  %v1071 = vrot.slane %v1066, %v1070
  %v1072 = vlaneseq
  %v1073 = vshrl.u32 %v1072, 7
  %v1074 = vsub.s32 1, %v1073
  %v1075 = vrot.slane %v1066, %v1074
  %v1078 = vmul.f32 %v1065, %v1071
  %v1079 = vmul.f32 %v1064, %v1075
  %v1080 = vadd.f32 %v1018, %v1078
  %v1081 = vadd.f32 %v1019, %v1079
  %v1082 = vadd.f32 %v1038, %v972
  %v1083 = vadd.f32 %v1039, %v974
  %1084 = vrot.lane.b32.xlu0 %v978, 127
  %v1085 = vpop.permute.xlu0 %1084
  %1086 = vrot.lane.b32.xlu0 %v980, 127
  %v1087 = vpop.permute.xlu0 %1086
  %v1088 = vsel %vm726, %v1085, %v1087
  %v1089 = vsel %vm726, %v1087, %v1085
  %v1090 = vld [vmem:[%s729] sm:$0x3]
  %v1092 = vlaneseq
  %v1093 = vshrl.u32 %v1092, 7
  %v1094 = vsub.s32 0, %v1093
  %v1095 = vrot.slane %v1090, %v1094
  %v1096 = vlaneseq
  %v1097 = vshrl.u32 %v1096, 7
  %v1098 = vsub.s32 1, %v1097
  %v1099 = vrot.slane %v1090, %v1098
  %v1102 = vmul.f32 %v1088, %v1095
  %v1103 = vmul.f32 %v1089, %v1099
  %v1104 = vadd.f32 %v1058, %v1102
  %v1105 = vadd.f32 %v1059, %v1103
  %1106 = vrot.lane.b32.xlu0 %v984, 117
  %v1107 = vpop.permute.xlu0 %1106
  %1108 = vrot.lane.b32.xlu0 %v986, 117
  %v1109 = vpop.permute.xlu0 %1108
  %v1110 = vsel %vm750, %v1107, %v1109
  %v1111 = vsel %vm750, %v1109, %v1107
  %v1112 = vld [vmem:[%s753] sm:$0x3]
  %v1114 = vlaneseq
  %v1115 = vshrl.u32 %v1114, 7
  %v1116 = vsub.s32 0, %v1115
  %v1117 = vrot.slane %v1112, %v1116
  %v1118 = vlaneseq
  %v1119 = vshrl.u32 %v1118, 7
  %v1120 = vsub.s32 1, %v1119
  %v1121 = vrot.slane %v1112, %v1120
  %v1124 = vmul.f32 %v1110, %v1117
  %v1125 = vmul.f32 %v1111, %v1121
  %v1126 = vadd.f32 %v1080, %v1124
  %v1127 = vadd.f32 %v1081, %v1125
  %1128 = vrot.lane.b32.xlu0 %v990, 116
  %v1129 = vpop.permute.xlu0 %1128
  %1130 = vrot.lane.b32.xlu0 %v992, 116
  %v1131 = vpop.permute.xlu0 %1130
  %v1132 = vsel %vm774, %v1129, %v1131
  %v1133 = vsel %vm774, %v1131, %v1129
  %v1134 = vld [vmem:[%s777] sm:$0x3]
  %v1136 = vlaneseq
  %v1137 = vshrl.u32 %v1136, 7
  %v1138 = vsub.s32 0, %v1137
  %v1139 = vrot.slane %v1134, %v1138
  %v1140 = vlaneseq
  %v1141 = vshrl.u32 %v1140, 7
  %v1142 = vsub.s32 1, %v1141
  %v1143 = vrot.slane %v1134, %v1142
  %v1146 = vmul.f32 %v1132, %v1139
  %v1147 = vmul.f32 %v1133, %v1143
  %v1148 = vadd.f32 %v1082, %v1146
  %v1149 = vadd.f32 %v1083, %v1147
  %1150 = vrot.lane.b32.xlu0 %v996, 115
  %v1151 = vpop.permute.xlu0 %1150
  %1152 = vrot.lane.b32.xlu0 %v998, 115
  %v1153 = vpop.permute.xlu0 %1152
  %v1154 = vsel %vm798, %v1151, %v1153
  %v1155 = vsel %vm798, %v1153, %v1151
  %v1156 = vld [vmem:[%s801] sm:$0x3]
  %v1158 = vlaneseq
  %v1159 = vshrl.u32 %v1158, 7
  %v1160 = vsub.s32 0, %v1159
  %v1161 = vrot.slane %v1156, %v1160
  %v1162 = vlaneseq
  %v1163 = vshrl.u32 %v1162, 7
  %v1164 = vsub.s32 1, %v1163
  %v1165 = vrot.slane %v1156, %v1164
  %v1168 = vmul.f32 %v1154, %v1161
  %v1169 = vmul.f32 %v1155, %v1165
  %v1170 = vadd.f32 %v1104, %v1168
  %v1171 = vadd.f32 %v1105, %v1169
  %v1172 = vadd.f32 %v1126, %v1148
  %v1173 = vadd.f32 %v1127, %v1149
  %v1174 = vld [vmem:[%s9] sm:$0xff]
  %1176 = vset.pattern.permute.xlu0 0
  %1177 = vperm.xlu0 %1176, %v1174
  %v1178 = vpop.permute.xlu0 %1177
  %v1180 = vadd.f32 %v1170, %v1178
  %v1181 = vadd.f32 %v1171, %v1178
  %v1182 = vadd.f32 %v1172, %v1180
  %v1183 = vadd.f32 %v1173, %v1181
  %vm1184 = vcmp.gt.f32.partialorder %v1182, 0.0
  %vm1185 = vcmp.gt.f32.partialorder %v1183, 0.0
  %v1186 = vld [vmem:[%s10] sm:$0xff]
  %1188 = vset.pattern.permute.xlu0 0
  %1189 = vperm.xlu0 %1188, %v1186
  %v1190 = vpop.permute.xlu0 %1189
  %v1192 = vmul.f32 %v1190, %v1182
  %v1193 = vmul.f32 %v1190, %v1183
  %v1194 = vsel %vm1184, %v1182, %v1192
  %v1195 = vsel %vm1185, %v1183, %v1193
  %s1196 = scalar_lea.vmem %s11, 16
  %1197 = vst [vmem:[%s1196] sm:$0xff] %v1194
  %1198 = vst.msk [vmem:[%s1196 + $0x8] sm:$0xff] %vm843, %v1195
  // Predicated region
  $region46: #{psp_head_forward.1} parent=0 // pred_check
    _
  $region47: #{psp_head_forward.1} parent=0 // pred_check_branch
    %1200 = sbr.rel (0) target = $region49
  $region48: #{psp_head_forward.1} parent=0 // pred_region
    _
  $region49: #{psp_head_forward.1} parent=0 // pred_fallthru
    _
  // Predicated region
  $region50: #{psp_head_forward.1} parent=0 // pred_check
    _
  $region51: #{psp_head_forward.1} parent=0 // pred_check_branch
    %1202 = sbr.rel (0) target = $region53
  $region52: #{psp_head_forward.1} parent=0 // pred_region
    _
  $region53: #{psp_head_forward.1} parent=0 // pred_fallthru
    _

</llo_original>
